<compile_context>
chip_gen: v7x
topology: tpu7x:2x2x1
jax: 0.10.0
libtpu: 0.0.40
codegen_flags: <defaults>
</compile_context>

<pallas_src>
import functools
import math

import numpy as np
import jax
import jax.numpy as jnp
from jax.experimental import pallas as pl
from jax.experimental.pallas import tpu as pltpu  # noqa: F401  (kept for TPU-specific tuning hooks)

# ---- model hyper-parameters (small, consistent with the module's __init__) ----
D_MODEL = 32
NUM_HEAD = 4
DIM_FF = 64
HEAD_DIM = D_MODEL // NUM_HEAD
LN_EPS = 1e-5            # nn.LayerNorm default eps
QKV_PAD = 128            # fused QKV projection width, padded to a full 128-lane tile
NEG_BIG = 1e9

# rows of the packed (8, 128) vector slab
VEC_BQKV, VEC_BO, VEC_LN1G, VEC_LN1B, VEC_FC1B, VEC_FC2B, VEC_LN2G, VEC_LN2B = range(8)


def _layernorm(x, gamma, beta):
    mu = jnp.mean(x, axis=-1, keepdims=True)
    var = jnp.mean((x - mu) ** 2, axis=-1, keepdims=True)   # biased variance (PyTorch LN)
    return (x - mu) * jax.lax.rsqrt(var + LN_EPS) * gamma + beta


def _gelu_exact(x):
    # nn.GELU() default = exact erf formulation
    return 0.5 * x * (1.0 + jax.lax.erf(x * (1.0 / math.sqrt(2.0))))


def encoder_layer_kernel(x_ref, mask_ref, wqkv_ref, w2_ref, vec_ref,
                         out_ref, attn_ref, *, batch, seq):
    D, H, Dh, F = D_MODEL, NUM_HEAD, HEAD_DIM, DIM_FF
    B, S = batch, seq

    x = x_ref[...]                            # (B*S, D) f32 -- whole problem resident in VMEM
    mask = mask_ref[...]                      # (B, 1, S) float, 1.0 = attend, 0.0 = masked
    vecs = vec_ref[...]                       # (8, 128) packed bias / LN vectors (one load)

    # Additive key-mask bias (== masked_fill(-1e9) for binary padding masks).
    mbias = (mask - 1.0) * NEG_BIG            # (B, 1, S)

    bqkv = vecs[VEC_BQKV:VEC_BQKV + 1, :]     # (1, 128), Q part already scaled by 1/sqrt(Dh)
    bo = vecs[VEC_BO:VEC_BO + 1, :D]
    ln1_g = vecs[VEC_LN1G:VEC_LN1G + 1, :D]
    ln1_b = vecs[VEC_LN1B:VEC_LN1B + 1, :D]
    fc1_b = vecs[VEC_FC1B:VEC_FC1B + 1, :F]
    fc2_b = vecs[VEC_FC2B:VEC_FC2B + 1, :D]
    ln2_g = vecs[VEC_LN2G:VEC_LN2G + 1, :D]
    ln2_b = vecs[VEC_LN2B:VEC_LN2B + 1, :D]

    # Fused, lane-padded QKV projection: one MXU pass (bf16 operands, f32 accumulate).
    qkv = jnp.dot(x.astype(jnp.bfloat16), wqkv_ref[...],
                  preferred_element_type=jnp.float32) + bqkv          # (B*S, 128) f32
    qkv_bf = qkv.astype(jnp.bfloat16)         # single cast; all score / P@V operands slice this

    # ---- scores for every (batch, head), then ONE batched softmax over the stack ----
    score_tiles = []
    for b in range(B):                        # B*H = 8 tiny static iterations
        rows = slice(b * S, (b + 1) * S)
        mb = mbias[b]                         # (1, S)
        for h in range(H):
            lo = h * Dh
            qh = qkv_bf[rows, lo:lo + Dh]                     # (S, Dh), pre-scaled
            kh = qkv_bf[rows, D + lo:D + lo + Dh]             # (S, Dh)
            s_bh = jax.lax.dot_general(
                qh, kh, (((1,), (1,)), ((), ())),
                preferred_element_type=jnp.float32) + mb      # (S, S), mask folded in as add
            score_tiles.append(s_bh)

    scores = jnp.concatenate(score_tiles, axis=0)             # (B*H*S, S)
    scores = scores - jnp.max(scores, axis=-1, keepdims=True)
    e = jnp.exp(scores)
    p_all = e * pl.reciprocal(jnp.sum(e, axis=-1, keepdims=True), approx=True)

    # Single store; wrapper reshapes (B*H*S, S) -> (B, H, S, S) with no transpose.
    attn_ref[...] = p_all

    p_bf = p_all.astype(jnp.bfloat16)

    # ---- P@V per head, lane-concat heads, ONE output-projection matmul ----
    ctx_rows = []
    for b in range(B):
        rows = slice(b * S, (b + 1) * S)
        ctx_heads = []
        for h in range(H):
            lo = h * Dh
            r0 = (b * H + h) * S
            vh = qkv_bf[rows, 2 * D + lo:2 * D + lo + Dh]     # (S, Dh)
            ctx_heads.append(jnp.dot(p_bf[r0:r0 + S, :], vh,
                                     preferred_element_type=jnp.float32))  # (S, Dh)
        ctx_rows.append(jnp.concatenate(ctx_heads, axis=-1))  # (S, D), stays within 32 lanes
    ctx = jnp.concatenate(ctx_rows, axis=0)                   # (B*S, D)

    wo = w2_ref[0:D, :D]                                      # (D, D) bf16
    attn_out = jnp.dot(ctx.astype(jnp.bfloat16), wo,
                       preferred_element_type=jnp.float32) + bo

    # F.dropout(training=False) -> identity
    x1 = _layernorm(x + attn_out, ln1_g, ln1_b)

    # ---------------- feed-forward ----------------
    fc1_w = w2_ref[D:2 * D, :F]                               # (D, F) bf16
    fc2_w = w2_ref[2 * D:2 * D + F, :D]                       # (F, D) bf16
    h1 = jnp.dot(x1.astype(jnp.bfloat16), fc1_w, preferred_element_type=jnp.float32) + fc1_b
    h1 = _gelu_exact(h1)
    h2 = jnp.dot(h1.astype(jnp.bfloat16), fc2_w, preferred_element_type=jnp.float32) + fc2_b
    x2 = _layernorm(x1 + h2, ln2_g, ln2_b)

    out_ref[...] = x2                                         # single (B*S, D) store


def prepare_params(params):
    """One-time parameter packing (NOT on the per-call path).

    Returns (wqkv, w2, vecs):
      wqkv: (D, 128) bf16  = [wq/sqrt(Dh) | wk | wv | 0-pad]
      w2:   (128, 128) bf16, rows 0:32 = wo, rows 32:64 = fc1_w, rows 64:128 = fc2_w
      vecs: (8, 128) f32, one packed row per bias / LN vector (Q bias pre-scaled)
    """
    (wq, bq, wk, bk, wv, bv, wo, bo, g1, be1, f1w, f1b, f2w, f2b, g2, be2) = params
    D, F = D_MODEL, DIM_FF
    scale = 1.0 / math.sqrt(HEAD_DIM)

    wqkv = jnp.zeros((D, QKV_PAD), jnp.float32)
    wqkv = wqkv.at[:, 0:D].set(wq * scale)
    wqkv = wqkv.at[:, D:2 * D].set(wk)
    wqkv = wqkv.at[:, 2 * D:3 * D].set(wv)
    wqkv = wqkv.astype(jnp.bfloat16)

    w2 = jnp.zeros((4 * D, 128), jnp.float32)     # 128 rows x 128 lanes
    w2 = w2.at[0:D, 0:D].set(wo)
    w2 = w2.at[D:2 * D, 0:F].set(f1w)
    w2 = w2.at[2 * D:2 * D + F, 0:D].set(f2w)
    w2 = w2.astype(jnp.bfloat16)

    vecs = jnp.zeros((8, 128), jnp.float32)
    vecs = vecs.at[VEC_BQKV, 0:D].set(bq[0] * scale)
    vecs = vecs.at[VEC_BQKV, D:2 * D].set(bk[0])
    vecs = vecs.at[VEC_BQKV, 2 * D:3 * D].set(bv[0])
    vecs = vecs.at[VEC_BO, 0:D].set(bo[0])
    vecs = vecs.at[VEC_LN1G, 0:D].set(g1[0])
    vecs = vecs.at[VEC_LN1B, 0:D].set(be1[0])
    vecs = vecs.at[VEC_FC1B, 0:F].set(f1b[0])
    vecs = vecs.at[VEC_FC2B, 0:D].set(f2b[0])
    vecs = vecs.at[VEC_LN2G, 0:D].set(g2[0])
    vecs = vecs.at[VEC_LN2B, 0:D].set(be2[0])
    return wqkv, w2, vecs


@jax.jit
def transformer_encoder_layer(x, mask, prepared):
    """x: (B, S, D) f32; mask: (B, 1, S) f32; prepared: output of prepare_params()."""
    wqkv, w2, vecs = prepared
    B, S, D = x.shape
    H = NUM_HEAD

    kernel = functools.partial(encoder_layer_kernel, batch=B, seq=S)

    # Grid-less call: the whole (tiny) problem is one kernel invocation, everything in VMEM.
    # (On v7x, add grid=(B,) + dimension_semantics=("parallel",) once B*S grows.)
    out_flat, attn_flat = pl.pallas_call(
        kernel,
        out_shape=(
            jax.ShapeDtypeStruct((B * S, D), jnp.float32),
            jax.ShapeDtypeStruct((B * H * S, S), jnp.float32),
        ),
    )(x.reshape(B * S, D), mask, wqkv, w2, vecs)

    out = out_flat.reshape(B, S, D)
    attn = attn_flat.reshape(B, H, S, S)      # stacked (b, h, q, k) order -> no transpose
    return out, attn


# ---------------- pure-JAX reference (PyTorch semantics) for a sanity check ----------------
def reference_forward(x, mask, params):
    (wq, bq, wk, bk, wv, bv, wo, bo, g1, be1, f1w, f1b, f2w, f2b, g2, be2) = params
    B, S, D = x.shape
    q = x @ wq + bq
    k = x @ wk + bk
    v = x @ wv + bv

    def split(t):
        return t.reshape(B, S, NUM_HEAD, HEAD_DIM).transpose(0, 2, 1, 3)

    qh, kh, vh = split(q), split(k), split(v)
    scores = jnp.einsum("bhqd,bhkd->bhqk", qh, kh) / math.sqrt(HEAD_DIM)
    scores = jnp.where(mask[:, :, None, :] > 0.0, scores, -1e9)
    attn = jax.nn.softmax(scores, axis=-1)
    out = jnp.einsum("bhqk,bhkd->bhqd", attn, vh).transpose(0, 2, 1, 3).reshape(B, S, D)
    out = out @ wo + bo
    x1 = _layernorm(x + out, g1, be1)
    h = _gelu_exact(x1 @ f1w + f1b)
    h = h @ f2w + f2b
    x2 = _layernorm(x1 + h, g2, be2)
    return x2, attn


if __name__ == "__main__":
    B, S, D, H, F = 2, 8, D_MODEL, NUM_HEAD, DIM_FF

    key = jax.random.PRNGKey(0)
    ks = jax.random.split(key, 16)
    w = lambda k, shape: (0.05 * jax.random.normal(k, shape, jnp.float32))

    params = [
        w(ks[0], (D, D)), w(ks[1], (1, D)),      # q proj
        w(ks[2], (D, D)), w(ks[3], (1, D)),      # k proj
        w(ks[4], (D, D)), w(ks[5], (1, D)),      # v proj
        w(ks[6], (D, D)), w(ks[7], (1, D)),      # out proj
        jnp.ones((1, D), jnp.float32), jnp.zeros((1, D), jnp.float32),   # LN1 gamma/beta
        w(ks[8], (D, F)), w(ks[9], (1, F)),      # fc1
        w(ks[10], (F, D)), w(ks[11], (1, D)),    # fc2
        jnp.ones((1, D), jnp.float32), jnp.zeros((1, D), jnp.float32),   # LN2 gamma/beta
    ]

    x = jax.random.normal(ks[12], (B, S, D), jnp.float32)
    # padding mask: batch 1 has its last 3 key positions masked out
    mask = jnp.ones((B, 1, S), jnp.float32).at[1, 0, S - 3:].set(0.0)

    prepared = prepare_params(params)        # one-time packing, off the per-call path

    y, attn = transformer_encoder_layer(x, mask, prepared)
    y = jax.block_until_ready(y)
    attn = jax.block_until_ready(attn)

    y_ref, attn_ref = reference_forward(x, mask, params)
    assert y.shape == (B, S, D) and attn.shape == (B, H, S, S)
    np.testing.assert_allclose(np.asarray(y), np.asarray(y_ref), rtol=2e-2, atol=2e-2)
    np.testing.assert_allclose(np.asarray(attn), np.asarray(attn_ref), rtol=2e-2, atol=2e-2)

    # TODO(synk): F.dropout has no inference-time effect; training-mode dropout (RNG masks)
    # is intentionally not implemented.
    print("KERNEL_OK")
</pallas_src>

<mosaic_0001>
module attributes {stable_mosaic.version = 11 : i64} {
  func.func @encoder_layer_kernel(%arg0: memref<16x32xf32, #tpu.memory_space<vmem>>, %arg1: memref<2x1x8xf32, #tpu.memory_space<vmem>>, %arg2: memref<32x128xbf16, #tpu.memory_space<vmem>>, %arg3: memref<128x128xbf16, #tpu.memory_space<vmem>>, %arg4: memref<8x128xf32, #tpu.memory_space<vmem>>, %arg5: memref<16x32xf32, #tpu.memory_space<vmem>>, %arg6: memref<64x8xf32, #tpu.memory_space<vmem>>) attributes {dimension_semantics = [], scalar_prefetch = 0 : i64, scratch_operands = 0 : i64, tpu.core_type = #tpu.core_type<tc>} {
    %c0 = arith.constant 0 : index
    %c0_0 = arith.constant 0 : index
    %0 = vector.load %arg0[%c0, %c0_0] : memref<16x32xf32, #tpu.memory_space<vmem>>, vector<16x32xf32>
    %c0_1 = arith.constant 0 : index
    %c0_2 = arith.constant 0 : index
    %c0_3 = arith.constant 0 : index
    %1 = vector.load %arg1[%c0_1, %c0_2, %c0_3] : memref<2x1x8xf32, #tpu.memory_space<vmem>>, vector<2x1x8xf32>
    %c0_4 = arith.constant 0 : index
    %c0_5 = arith.constant 0 : index
    %2 = vector.load %arg4[%c0_4, %c0_5] : memref<8x128xf32, #tpu.memory_space<vmem>>, vector<8x128xf32>
    %cst = arith.constant 1.000000e+00 : f32
    %3 = vector.broadcast %cst : f32 to vector<2x1x8xf32>
    %4 = arith.subf %1, %3 : vector<2x1x8xf32>
    %cst_6 = arith.constant 1.000000e+09 : f32
    %5 = vector.broadcast %cst_6 : f32 to vector<2x1x8xf32>
    %6 = arith.mulf %4, %5 : vector<2x1x8xf32>
    %7 = vector.extract_strided_slice %2 {offsets = [0, 0], sizes = [1, 128], strides = [1, 1]} : vector<8x128xf32> to vector<1x128xf32>
    %8 = vector.extract_strided_slice %2 {offsets = [1, 0], sizes = [1, 32], strides = [1, 1]} : vector<8x128xf32> to vector<1x32xf32>
    %9 = vector.extract_strided_slice %2 {offsets = [2, 0], sizes = [1, 32], strides = [1, 1]} : vector<8x128xf32> to vector<1x32xf32>
    %10 = vector.extract_strided_slice %2 {offsets = [3, 0], sizes = [1, 32], strides = [1, 1]} : vector<8x128xf32> to vector<1x32xf32>
    %11 = vector.extract_strided_slice %2 {offsets = [4, 0], sizes = [1, 64], strides = [1, 1]} : vector<8x128xf32> to vector<1x64xf32>
    %12 = vector.extract_strided_slice %2 {offsets = [5, 0], sizes = [1, 32], strides = [1, 1]} : vector<8x128xf32> to vector<1x32xf32>
    %13 = vector.extract_strided_slice %2 {offsets = [6, 0], sizes = [1, 32], strides = [1, 1]} : vector<8x128xf32> to vector<1x32xf32>
    %14 = vector.extract_strided_slice %2 {offsets = [7, 0], sizes = [1, 32], strides = [1, 1]} : vector<8x128xf32> to vector<1x32xf32>
    %15 = arith.truncf %0 : vector<16x32xf32> to vector<16x32xbf16>
    %c0_7 = arith.constant 0 : index
    %c0_8 = arith.constant 0 : index
    %16 = vector.load %arg2[%c0_7, %c0_8] : memref<32x128xbf16, #tpu.memory_space<vmem>>, vector<32x128xbf16>
    %cst_9 = arith.constant dense<0.000000e+00> : vector<16x128xf32>
    %17 = tpu.matmul %15, %16, %cst_9 {dimension_numbers = #tpu.dot_dimension_numbers<[1], [0], [0], [1], [0, 0, 1, 1], [], []>} : vector<16x32xbf16>, vector<32x128xbf16>, vector<16x128xf32> -> vector<16x128xf32>
    %18 = vector.broadcast %7 : vector<1x128xf32> to vector<16x128xf32>
    %19 = arith.addf %17, %18 : vector<16x128xf32>
    %20 = arith.truncf %19 : vector<16x128xf32> to vector<16x128xbf16>
    %21 = vector.extract_strided_slice %6 {offsets = [0, 0, 0], sizes = [1, 1, 8], strides = [1, 1, 1]} : vector<2x1x8xf32> to vector<1x1x8xf32>
    %22 = vector.shape_cast %21 : vector<1x1x8xf32> to vector<1x8xf32>
    %23 = vector.extract_strided_slice %20 {offsets = [0, 0], sizes = [8, 8], strides = [1, 1]} : vector<16x128xbf16> to vector<8x8xbf16>
    %24 = vector.extract_strided_slice %20 {offsets = [0, 32], sizes = [8, 8], strides = [1, 1]} : vector<16x128xbf16> to vector<8x8xbf16>
    %cst_10 = arith.constant dense<0.000000e+00> : vector<8x8xf32>
    %25 = tpu.matmul %23, %24, %cst_10 {dimension_numbers = #tpu.dot_dimension_numbers<[1], [1], [0], [0], [0, 0, 1, 0], [], []>} : vector<8x8xbf16>, vector<8x8xbf16>, vector<8x8xf32> -> vector<8x8xf32>
    %26 = vector.broadcast %22 : vector<1x8xf32> to vector<8x8xf32>
    %27 = arith.addf %25, %26 : vector<8x8xf32>
    %28 = vector.extract_strided_slice %20 {offsets = [0, 8], sizes = [8, 8], strides = [1, 1]} : vector<16x128xbf16> to vector<8x8xbf16>
    %29 = vector.extract_strided_slice %20 {offsets = [0, 40], sizes = [8, 8], strides = [1, 1]} : vector<16x128xbf16> to vector<8x8xbf16>
    %cst_11 = arith.constant dense<0.000000e+00> : vector<8x8xf32>
    %30 = tpu.matmul %28, %29, %cst_11 {dimension_numbers = #tpu.dot_dimension_numbers<[1], [1], [0], [0], [0, 0, 1, 0], [], []>} : vector<8x8xbf16>, vector<8x8xbf16>, vector<8x8xf32> -> vector<8x8xf32>
    %31 = vector.broadcast %22 : vector<1x8xf32> to vector<8x8xf32>
    %32 = arith.addf %30, %31 : vector<8x8xf32>
    %33 = vector.extract_strided_slice %20 {offsets = [0, 16], sizes = [8, 8], strides = [1, 1]} : vector<16x128xbf16> to vector<8x8xbf16>
    %34 = vector.extract_strided_slice %20 {offsets = [0, 48], sizes = [8, 8], strides = [1, 1]} : vector<16x128xbf16> to vector<8x8xbf16>
    %cst_12 = arith.constant dense<0.000000e+00> : vector<8x8xf32>
    %35 = tpu.matmul %33, %34, %cst_12 {dimension_numbers = #tpu.dot_dimension_numbers<[1], [1], [0], [0], [0, 0, 1, 0], [], []>} : vector<8x8xbf16>, vector<8x8xbf16>, vector<8x8xf32> -> vector<8x8xf32>
    %36 = vector.broadcast %22 : vector<1x8xf32> to vector<8x8xf32>
    %37 = arith.addf %35, %36 : vector<8x8xf32>
    %38 = vector.extract_strided_slice %20 {offsets = [0, 24], sizes = [8, 8], strides = [1, 1]} : vector<16x128xbf16> to vector<8x8xbf16>
    %39 = vector.extract_strided_slice %20 {offsets = [0, 56], sizes = [8, 8], strides = [1, 1]} : vector<16x128xbf16> to vector<8x8xbf16>
    %cst_13 = arith.constant dense<0.000000e+00> : vector<8x8xf32>
    %40 = tpu.matmul %38, %39, %cst_13 {dimension_numbers = #tpu.dot_dimension_numbers<[1], [1], [0], [0], [0, 0, 1, 0], [], []>} : vector<8x8xbf16>, vector<8x8xbf16>, vector<8x8xf32> -> vector<8x8xf32>
    %41 = vector.broadcast %22 : vector<1x8xf32> to vector<8x8xf32>
    %42 = arith.addf %40, %41 : vector<8x8xf32>
    %43 = vector.extract_strided_slice %6 {offsets = [1, 0, 0], sizes = [1, 1, 8], strides = [1, 1, 1]} : vector<2x1x8xf32> to vector<1x1x8xf32>
    %44 = vector.shape_cast %43 : vector<1x1x8xf32> to vector<1x8xf32>
    %45 = vector.extract_strided_slice %20 {offsets = [8, 0], sizes = [8, 8], strides = [1, 1]} : vector<16x128xbf16> to vector<8x8xbf16>
    %46 = vector.extract_strided_slice %20 {offsets = [8, 32], sizes = [8, 8], strides = [1, 1]} : vector<16x128xbf16> to vector<8x8xbf16>
    %cst_14 = arith.constant dense<0.000000e+00> : vector<8x8xf32>
    %47 = tpu.matmul %45, %46, %cst_14 {dimension_numbers = #tpu.dot_dimension_numbers<[1], [1], [0], [0], [0, 0, 1, 0], [], []>} : vector<8x8xbf16>, vector<8x8xbf16>, vector<8x8xf32> -> vector<8x8xf32>
    %48 = vector.broadcast %44 : vector<1x8xf32> to vector<8x8xf32>
    %49 = arith.addf %47, %48 : vector<8x8xf32>
    %50 = vector.extract_strided_slice %20 {offsets = [8, 8], sizes = [8, 8], strides = [1, 1]} : vector<16x128xbf16> to vector<8x8xbf16>
    %51 = vector.extract_strided_slice %20 {offsets = [8, 40], sizes = [8, 8], strides = [1, 1]} : vector<16x128xbf16> to vector<8x8xbf16>
    %cst_15 = arith.constant dense<0.000000e+00> : vector<8x8xf32>
    %52 = tpu.matmul %50, %51, %cst_15 {dimension_numbers = #tpu.dot_dimension_numbers<[1], [1], [0], [0], [0, 0, 1, 0], [], []>} : vector<8x8xbf16>, vector<8x8xbf16>, vector<8x8xf32> -> vector<8x8xf32>
    %53 = vector.broadcast %44 : vector<1x8xf32> to vector<8x8xf32>
    %54 = arith.addf %52, %53 : vector<8x8xf32>
    %55 = vector.extract_strided_slice %20 {offsets = [8, 16], sizes = [8, 8], strides = [1, 1]} : vector<16x128xbf16> to vector<8x8xbf16>
    %56 = vector.extract_strided_slice %20 {offsets = [8, 48], sizes = [8, 8], strides = [1, 1]} : vector<16x128xbf16> to vector<8x8xbf16>
    %cst_16 = arith.constant dense<0.000000e+00> : vector<8x8xf32>
    %57 = tpu.matmul %55, %56, %cst_16 {dimension_numbers = #tpu.dot_dimension_numbers<[1], [1], [0], [0], [0, 0, 1, 0], [], []>} : vector<8x8xbf16>, vector<8x8xbf16>, vector<8x8xf32> -> vector<8x8xf32>
    %58 = vector.broadcast %44 : vector<1x8xf32> to vector<8x8xf32>
    %59 = arith.addf %57, %58 : vector<8x8xf32>
    %60 = vector.extract_strided_slice %20 {offsets = [8, 24], sizes = [8, 8], strides = [1, 1]} : vector<16x128xbf16> to vector<8x8xbf16>
    %61 = vector.extract_strided_slice %20 {offsets = [8, 56], sizes = [8, 8], strides = [1, 1]} : vector<16x128xbf16> to vector<8x8xbf16>
    %cst_17 = arith.constant dense<0.000000e+00> : vector<8x8xf32>
    %62 = tpu.matmul %60, %61, %cst_17 {dimension_numbers = #tpu.dot_dimension_numbers<[1], [1], [0], [0], [0, 0, 1, 0], [], []>} : vector<8x8xbf16>, vector<8x8xbf16>, vector<8x8xf32> -> vector<8x8xf32>
    %63 = vector.broadcast %44 : vector<1x8xf32> to vector<8x8xf32>
    %64 = arith.addf %62, %63 : vector<8x8xf32>
    %65 = tpu.concatenate %27, %32, %37, %42, %49, %54, %59, %64 in 0 : vector<8x8xf32>, vector<8x8xf32>, vector<8x8xf32>, vector<8x8xf32>, vector<8x8xf32>, vector<8x8xf32>, vector<8x8xf32>, vector<8x8xf32> -> vector<64x8xf32>
    %cst_18 = arith.constant dense<0xFF800000> : vector<64xf32>
    %66 = vector.multi_reduction <maximumf>, %65, %cst_18 [1] : vector<64x8xf32> to vector<64xf32>
    %67 = vector.shape_cast %66 : vector<64xf32> to vector<64x1xf32>
    %68 = vector.broadcast %67 : vector<64x1xf32> to vector<64x8xf32>
    %69 = arith.subf %65, %68 : vector<64x8xf32>
    %70 = math.exp %69 : vector<64x8xf32>
    %cst_19 = arith.constant dense<0.000000e+00> : vector<64xf32>
    %71 = vector.multi_reduction <add>, %70, %cst_19 [1] : vector<64x8xf32> to vector<64xf32>
    %72 = vector.shape_cast %71 : vector<64xf32> to vector<64x1xf32>
    %73 = tpu.reciprocal %72 {approx = true} : vector<64x1xf32> -> vector<64x1xf32>
    %74 = vector.broadcast %73 : vector<64x1xf32> to vector<64x8xf32>
    %75 = arith.mulf %70, %74 : vector<64x8xf32>
    %c0_20 = arith.constant 0 : index
    %c0_21 = arith.constant 0 : index
    %76 = vector.load %arg6[%c0_20, %c0_21] : memref<64x8xf32, #tpu.memory_space<vmem>>, vector<64x8xf32>
    tpu.vector_store %arg6[%c0_20, %c0_21], %75 {strides = array<i32>} : memref<64x8xf32, #tpu.memory_space<vmem>>, vector<64x8xf32>,
    %77 = arith.truncf %75 : vector<64x8xf32> to vector<64x8xbf16>
    %78 = vector.extract_strided_slice %20 {offsets = [0, 64], sizes = [8, 8], strides = [1, 1]} : vector<16x128xbf16> to vector<8x8xbf16>
    %79 = vector.extract_strided_slice %77 {offsets = [0, 0], sizes = [8, 8], strides = [1, 1]} : vector<64x8xbf16> to vector<8x8xbf16>
    %cst_22 = arith.constant dense<0.000000e+00> : vector<8x8xf32>
    %80 = tpu.matmul %79, %78, %cst_22 {dimension_numbers = #tpu.dot_dimension_numbers<[1], [0], [0], [1], [0, 0, 1, 1], [], []>} : vector<8x8xbf16>, vector<8x8xbf16>, vector<8x8xf32> -> vector<8x8xf32>
    %81 = vector.extract_strided_slice %20 {offsets = [0, 72], sizes = [8, 8], strides = [1, 1]} : vector<16x128xbf16> to vector<8x8xbf16>
    %82 = vector.extract_strided_slice %77 {offsets = [8, 0], sizes = [8, 8], strides = [1, 1]} : vector<64x8xbf16> to vector<8x8xbf16>
    %cst_23 = arith.constant dense<0.000000e+00> : vector<8x8xf32>
    %83 = tpu.matmul %82, %81, %cst_23 {dimension_numbers = #tpu.dot_dimension_numbers<[1], [0], [0], [1], [0, 0, 1, 1], [], []>} : vector<8x8xbf16>, vector<8x8xbf16>, vector<8x8xf32> -> vector<8x8xf32>
    %84 = vector.extract_strided_slice %20 {offsets = [0, 80], sizes = [8, 8], strides = [1, 1]} : vector<16x128xbf16> to vector<8x8xbf16>
    %85 = vector.extract_strided_slice %77 {offsets = [16, 0], sizes = [8, 8], strides = [1, 1]} : vector<64x8xbf16> to vector<8x8xbf16>
    %cst_24 = arith.constant dense<0.000000e+00> : vector<8x8xf32>
    %86 = tpu.matmul %85, %84, %cst_24 {dimension_numbers = #tpu.dot_dimension_numbers<[1], [0], [0], [1], [0, 0, 1, 1], [], []>} : vector<8x8xbf16>, vector<8x8xbf16>, vector<8x8xf32> -> vector<8x8xf32>
    %87 = vector.extract_strided_slice %20 {offsets = [0, 88], sizes = [8, 8], strides = [1, 1]} : vector<16x128xbf16> to vector<8x8xbf16>
    %88 = vector.extract_strided_slice %77 {offsets = [24, 0], sizes = [8, 8], strides = [1, 1]} : vector<64x8xbf16> to vector<8x8xbf16>
    %cst_25 = arith.constant dense<0.000000e+00> : vector<8x8xf32>
    %89 = tpu.matmul %88, %87, %cst_25 {dimension_numbers = #tpu.dot_dimension_numbers<[1], [0], [0], [1], [0, 0, 1, 1], [], []>} : vector<8x8xbf16>, vector<8x8xbf16>, vector<8x8xf32> -> vector<8x8xf32>
    %90 = tpu.concatenate %80, %83, %86, %89 in 1 : vector<8x8xf32>, vector<8x8xf32>, vector<8x8xf32>, vector<8x8xf32> -> vector<8x32xf32>
    %91 = vector.extract_strided_slice %20 {offsets = [8, 64], sizes = [8, 8], strides = [1, 1]} : vector<16x128xbf16> to vector<8x8xbf16>
    %92 = vector.extract_strided_slice %77 {offsets = [32, 0], sizes = [8, 8], strides = [1, 1]} : vector<64x8xbf16> to vector<8x8xbf16>
    %cst_26 = arith.constant dense<0.000000e+00> : vector<8x8xf32>
    %93 = tpu.matmul %92, %91, %cst_26 {dimension_numbers = #tpu.dot_dimension_numbers<[1], [0], [0], [1], [0, 0, 1, 1], [], []>} : vector<8x8xbf16>, vector<8x8xbf16>, vector<8x8xf32> -> vector<8x8xf32>
    %94 = vector.extract_strided_slice %20 {offsets = [8, 72], sizes = [8, 8], strides = [1, 1]} : vector<16x128xbf16> to vector<8x8xbf16>
    %95 = vector.extract_strided_slice %77 {offsets = [40, 0], sizes = [8, 8], strides = [1, 1]} : vector<64x8xbf16> to vector<8x8xbf16>
    %cst_27 = arith.constant dense<0.000000e+00> : vector<8x8xf32>
    %96 = tpu.matmul %95, %94, %cst_27 {dimension_numbers = #tpu.dot_dimension_numbers<[1], [0], [0], [1], [0, 0, 1, 1], [], []>} : vector<8x8xbf16>, vector<8x8xbf16>, vector<8x8xf32> -> vector<8x8xf32>
    %97 = vector.extract_strided_slice %20 {offsets = [8, 80], sizes = [8, 8], strides = [1, 1]} : vector<16x128xbf16> to vector<8x8xbf16>
    %98 = vector.extract_strided_slice %77 {offsets = [48, 0], sizes = [8, 8], strides = [1, 1]} : vector<64x8xbf16> to vector<8x8xbf16>
    %cst_28 = arith.constant dense<0.000000e+00> : vector<8x8xf32>
    %99 = tpu.matmul %98, %97, %cst_28 {dimension_numbers = #tpu.dot_dimension_numbers<[1], [0], [0], [1], [0, 0, 1, 1], [], []>} : vector<8x8xbf16>, vector<8x8xbf16>, vector<8x8xf32> -> vector<8x8xf32>
    %100 = vector.extract_strided_slice %20 {offsets = [8, 88], sizes = [8, 8], strides = [1, 1]} : vector<16x128xbf16> to vector<8x8xbf16>
    %101 = vector.extract_strided_slice %77 {offsets = [56, 0], sizes = [8, 8], strides = [1, 1]} : vector<64x8xbf16> to vector<8x8xbf16>
    %cst_29 = arith.constant dense<0.000000e+00> : vector<8x8xf32>
    %102 = tpu.matmul %101, %100, %cst_29 {dimension_numbers = #tpu.dot_dimension_numbers<[1], [0], [0], [1], [0, 0, 1, 1], [], []>} : vector<8x8xbf16>, vector<8x8xbf16>, vector<8x8xf32> -> vector<8x8xf32>
    %103 = tpu.concatenate %93, %96, %99, %102 in 1 : vector<8x8xf32>, vector<8x8xf32>, vector<8x8xf32>, vector<8x8xf32> -> vector<8x32xf32>
    %104 = tpu.concatenate %90, %103 in 0 : vector<8x32xf32>, vector<8x32xf32> -> vector<16x32xf32>
    %c0_30 = arith.constant 0 : index
    %c0_31 = arith.constant 0 : index
    %105 = vector.load %arg3[%c0_30, %c0_31] : memref<128x128xbf16, #tpu.memory_space<vmem>>, vector<32x32xbf16>
    %106 = arith.truncf %104 : vector<16x32xf32> to vector<16x32xbf16>
    %cst_32 = arith.constant dense<0.000000e+00> : vector<16x32xf32>
    %107 = tpu.matmul %106, %105, %cst_32 {dimension_numbers = #tpu.dot_dimension_numbers<[1], [0], [0], [1], [0, 0, 1, 1], [], []>} : vector<16x32xbf16>, vector<32x32xbf16>, vector<16x32xf32> -> vector<16x32xf32>
    %108 = vector.broadcast %8 : vector<1x32xf32> to vector<16x32xf32>
    %109 = arith.addf %107, %108 : vector<16x32xf32>
    %110 = arith.addf %0, %109 : vector<16x32xf32>
    %cst_33 = arith.constant dense<0.000000e+00> : vector<16xf32>
    %111 = vector.multi_reduction <add>, %110, %cst_33 [1] : vector<16x32xf32> to vector<16xf32>
    %112 = vector.shape_cast %111 : vector<16xf32> to vector<16x1xf32>
    %cst_34 = arith.constant 3.200000e+01 : f32
    %113 = vector.broadcast %cst_34 : f32 to vector<16x1xf32>
    %114 = arith.divf %112, %113 : vector<16x1xf32>
    %115 = vector.broadcast %114 : vector<16x1xf32> to vector<16x32xf32>
    %116 = arith.subf %110, %115 : vector<16x32xf32>
    %117 = arith.mulf %116, %116 : vector<16x32xf32>
    %cst_35 = arith.constant dense<0.000000e+00> : vector<16xf32>
    %118 = vector.multi_reduction <add>, %117, %cst_35 [1] : vector<16x32xf32> to vector<16xf32>
    %119 = vector.shape_cast %118 : vector<16xf32> to vector<16x1xf32>
    %cst_36 = arith.constant 3.200000e+01 : f32
    %120 = vector.broadcast %cst_36 : f32 to vector<16x1xf32>
    %121 = arith.divf %119, %120 : vector<16x1xf32>
    %122 = vector.broadcast %114 : vector<16x1xf32> to vector<16x32xf32>
    %123 = arith.subf %110, %122 : vector<16x32xf32>
    %cst_37 = arith.constant 9.99999974E-6 : f32
    %124 = vector.broadcast %cst_37 : f32 to vector<16x1xf32>
    %125 = arith.addf %121, %124 : vector<16x1xf32>
    %126 = math.rsqrt %125 : vector<16x1xf32>
    %127 = vector.broadcast %126 : vector<16x1xf32> to vector<16x32xf32>
    %128 = arith.mulf %123, %127 : vector<16x32xf32>
    %129 = vector.broadcast %9 : vector<1x32xf32> to vector<16x32xf32>
    %130 = arith.mulf %128, %129 : vector<16x32xf32>
    %131 = vector.broadcast %10 : vector<1x32xf32> to vector<16x32xf32>
    %132 = arith.addf %130, %131 : vector<16x32xf32>
    %c32 = arith.constant 32 : index
    %c0_38 = arith.constant 0 : index
    %133 = vector.load %arg3[%c32, %c0_38] : memref<128x128xbf16, #tpu.memory_space<vmem>>, vector<32x64xbf16>
    %c64 = arith.constant 64 : index
    %c0_39 = arith.constant 0 : index
    %134 = vector.load %arg3[%c64, %c0_39] : memref<128x128xbf16, #tpu.memory_space<vmem>>, vector<64x32xbf16>
    %135 = arith.truncf %132 : vector<16x32xf32> to vector<16x32xbf16>
    %cst_40 = arith.constant dense<0.000000e+00> : vector<16x64xf32>
    %136 = tpu.matmul %135, %133, %cst_40 {dimension_numbers = #tpu.dot_dimension_numbers<[1], [0], [0], [1], [0, 0, 1, 1], [], []>} : vector<16x32xbf16>, vector<32x64xbf16>, vector<16x64xf32> -> vector<16x64xf32>
    %137 = vector.broadcast %11 : vector<1x64xf32> to vector<16x64xf32>
    %138 = arith.addf %136, %137 : vector<16x64xf32>
    %cst_41 = arith.constant 5.000000e-01 : f32
    %139 = vector.broadcast %cst_41 : f32 to vector<16x64xf32>
    %140 = arith.mulf %139, %138 : vector<16x64xf32>
    %cst_42 = arith.constant 0.707106769 : f32
    %141 = vector.broadcast %cst_42 : f32 to vector<16x64xf32>
    %142 = arith.mulf %138, %141 : vector<16x64xf32>
    %143 = math.erf %142 : vector<16x64xf32>
    %cst_43 = arith.constant 1.000000e+00 : f32
    %144 = vector.broadcast %cst_43 : f32 to vector<16x64xf32>
    %145 = arith.addf %144, %143 : vector<16x64xf32>
    %146 = arith.mulf %140, %145 : vector<16x64xf32>
    %147 = arith.truncf %146 : vector<16x64xf32> to vector<16x64xbf16>
    %cst_44 = arith.constant dense<0.000000e+00> : vector<16x32xf32>
    %148 = tpu.matmul %147, %134, %cst_44 {dimension_numbers = #tpu.dot_dimension_numbers<[1], [0], [0], [1], [0, 0, 1, 1], [], []>} : vector<16x64xbf16>, vector<64x32xbf16>, vector<16x32xf32> -> vector<16x32xf32>
    %149 = vector.broadcast %12 : vector<1x32xf32> to vector<16x32xf32>
    %150 = arith.addf %148, %149 : vector<16x32xf32>
    %151 = arith.addf %132, %150 : vector<16x32xf32>
    %cst_45 = arith.constant dense<0.000000e+00> : vector<16xf32>
    %152 = vector.multi_reduction <add>, %151, %cst_45 [1] : vector<16x32xf32> to vector<16xf32>
    %153 = vector.shape_cast %152 : vector<16xf32> to vector<16x1xf32>
    %cst_46 = arith.constant 3.200000e+01 : f32
    %154 = vector.broadcast %cst_46 : f32 to vector<16x1xf32>
    %155 = arith.divf %153, %154 : vector<16x1xf32>
    %156 = vector.broadcast %155 : vector<16x1xf32> to vector<16x32xf32>
    %157 = arith.subf %151, %156 : vector<16x32xf32>
    %158 = arith.mulf %157, %157 : vector<16x32xf32>
    %cst_47 = arith.constant dense<0.000000e+00> : vector<16xf32>
    %159 = vector.multi_reduction <add>, %158, %cst_47 [1] : vector<16x32xf32> to vector<16xf32>
    %160 = vector.shape_cast %159 : vector<16xf32> to vector<16x1xf32>
    %cst_48 = arith.constant 3.200000e+01 : f32
    %161 = vector.broadcast %cst_48 : f32 to vector<16x1xf32>
    %162 = arith.divf %160, %161 : vector<16x1xf32>
    %163 = vector.broadcast %155 : vector<16x1xf32> to vector<16x32xf32>
    %164 = arith.subf %151, %163 : vector<16x32xf32>
    %cst_49 = arith.constant 9.99999974E-6 : f32
    %165 = vector.broadcast %cst_49 : f32 to vector<16x1xf32>
    %166 = arith.addf %162, %165 : vector<16x1xf32>
    %167 = math.rsqrt %166 : vector<16x1xf32>
    %168 = vector.broadcast %167 : vector<16x1xf32> to vector<16x32xf32>
    %169 = arith.mulf %164, %168 : vector<16x32xf32>
    %170 = vector.broadcast %13 : vector<1x32xf32> to vector<16x32xf32>
    %171 = arith.mulf %169, %170 : vector<16x32xf32>
    %172 = vector.broadcast %14 : vector<1x32xf32> to vector<16x32xf32>
    %173 = arith.addf %171, %172 : vector<16x32xf32>
    %c0_50 = arith.constant 0 : index
    %c0_51 = arith.constant 0 : index
    %174 = vector.load %arg5[%c0_50, %c0_51] : memref<16x32xf32, #tpu.memory_space<vmem>>, vector<16x32xf32>
    tpu.vector_store %arg5[%c0_50, %c0_51], %173 {strides = array<i32>} : memref<16x32xf32, #tpu.memory_space<vmem>>, vector<16x32xf32>,
    return
  }
}

</mosaic_0001>

<llo_original>
// kernel: transformer_encoder_layer.1
$region0: #{transformer_encoder_layer.1}
  #allocation0 [shape = 'u32[]', space=smem, size = 0x4, offset = 0x4, fixed_abs, tag = 'smem constant byte address 0x4 - core index']
  #allocation1 [shape = 'u32[144,128]{1,0:T(1,128)}', space=vmem, size = 0x12000, scoped, tag = 'internal scratch']
  %s0 = inlined_call_operand.hbm [shape: f32[16,32], index: 0, kind: input, shape index: {}]
  %s1 = inlined_call_operand.vmem [shape: f32[2,1,8], index: 1, kind: input, shape index: {}]
  %s2 = inlined_call_operand.hbm [shape: bf16[32,128], index: 2, kind: input, shape index: {}]
  %s3 = inlined_call_operand.hbm [shape: bf16[128,128], index: 3, kind: input, shape index: {}]
  %s4 = inlined_call_operand.vmem [shape: f32[8,128], index: 4, kind: input, shape index: {}]
  %s5 = inlined_call_operand.hbm [shape: f32[16,32], index: 5, kind: output, shape index: {0}]
  %s6 = inlined_call_operand.hbm [shape: f32[64,8], index: 6, kind: output, shape index: {1}]
  %7 = xla_tuple %s5, %s6
  %s8 = sld [smem:[#allocation0]]
  $region50: #{transformer_encoder_layer.1} parent=0
    _
  %s10 = ssub.s32 1, %s8
  %s11 = scalar_select 0, %s10, %s8
  $region1: #{transformer_encoder_layer.1} parent=0
    #allocation2 [shape = 'u8[8192]{0}', space=vmem, size = 0x2000, scoped, tag = 'input window, operand 0, single buffered']
    #allocation3 [shape = 's32[1]{0}', space=sflag, size = 0x4, scoped, tag = 'scoped memory for transformer_encoder_layer.1']
    #allocation4 [shape = 's32[1]{0}', space=sflag, size = 0x4, scoped, tag = 'scoped memory for transformer_encoder_layer.1']
    #allocation5 [shape = 'u8[8192]{0}', space=vmem, size = 0x2000, scoped, tag = 'input window, operand 2, single buffered']
    #allocation6 [shape = 's32[1]{0}', space=sflag, size = 0x4, scoped, tag = 'scoped memory for transformer_encoder_layer.1']
    #allocation7 [shape = 'u8[32768]{0}', space=vmem, size = 0x8000, scoped, tag = 'input window, operand 3, single buffered']
    #allocation8 [shape = 'u8[8192]{0}', space=vmem, size = 0x2000, scoped, tag = 'output window, operand 0, single buffered']
    #allocation9 [shape = 'u8[32768]{0}', space=vmem, size = 0x8000, scoped, tag = 'output window, operand 1, single buffered']
    #allocation10 [shape = 's32[1]{0}', space=sflag, size = 0x4, scoped, tag = 'scoped memory for transformer_encoder_layer.1']
    %12 = vsyncpa [#allocation3], 0
    %13 = vsyncpa [#allocation6], 0
    %14 = vsyncpa [#allocation4], 0
    %15 = vsyncpa [#allocation10], 0
    // Predicated region
    $region2: #{transformer_encoder_layer.1} parent=1 // pred_check
      _
    $region3: #{transformer_encoder_layer.1} parent=1 // pred_check_branch
      %17 = sbr.rel (0) target = $region5
    $region4: #{transformer_encoder_layer.1} parent=1 // pred_region
      %s19 = ssub.s32 256, 256
      %20 = vsyncadd [#allocation3], %s19
      %s21 = sshll.u32 [#allocation2], 4
      %s22 = int_to_ptr.vmem [resolvable:$true] %s21
      %27 = dma.hbm_to_vmem [thread:$0]  %s0, 256, %s22, [#allocation3], 128, 128, 8
    $region5: #{transformer_encoder_layer.1} parent=1 // pred_fallthru
      _
    // Predicated region
    $region6: #{transformer_encoder_layer.1} parent=1 // pred_check
      _
    $region7: #{transformer_encoder_layer.1} parent=1 // pred_check_branch
      %29 = sbr.rel (0) target = $region9
    $region8: #{transformer_encoder_layer.1} parent=1 // pred_region
      _
    $region9: #{transformer_encoder_layer.1} parent=1 // pred_fallthru
      _
    // Predicated region
    $region10: #{transformer_encoder_layer.1} parent=1 // pred_check
      _
    $region11: #{transformer_encoder_layer.1} parent=1 // pred_check_branch
      %31 = sbr.rel (0) target = $region13
    $region12: #{transformer_encoder_layer.1} parent=1 // pred_region
      %s33 = ssub.s32 256, 256
      %34 = vsyncadd [#allocation6], %s33
      %s35 = sshll.u32 [#allocation5], 4
      %s36 = int_to_ptr.vmem [resolvable:$true] %s35
      %41 = dma.hbm_to_vmem [thread:$0]  %s2, 256, %s36, [#allocation6], 64, 64, 4
    $region13: #{transformer_encoder_layer.1} parent=1 // pred_fallthru
      _
    // Predicated region
    $region14: #{transformer_encoder_layer.1} parent=1 // pred_check
      _
    $region15: #{transformer_encoder_layer.1} parent=1 // pred_check_branch
      %43 = sbr.rel (0) target = $region17
    $region16: #{transformer_encoder_layer.1} parent=1 // pred_region
      %s45 = ssub.s32 1024, 1024
      %46 = vsyncadd [#allocation6], %s45
      %s47 = sshll.u32 [#allocation7], 4
      %s48 = int_to_ptr.vmem [resolvable:$true] %s47
      %53 = dma.hbm_to_vmem [thread:$0]  %s3, 1024, %s48, [#allocation6], 64, 64, 4
    $region17: #{transformer_encoder_layer.1} parent=1 // pred_fallthru
      _
    // Predicated region
    $region18: #{transformer_encoder_layer.1} parent=1 // pred_check
      _
    $region19: #{transformer_encoder_layer.1} parent=1 // pred_check_branch
      %55 = sbr.rel (0) target = $region21
    $region20: #{transformer_encoder_layer.1} parent=1 // pred_region
      _
    $region21: #{transformer_encoder_layer.1} parent=1 // pred_fallthru
      _
    // Predicated region
    $region22: #{transformer_encoder_layer.1} parent=1 // pred_check
      _
    $region23: #{transformer_encoder_layer.1} parent=1 // pred_check_branch
      %57 = sbr.rel (0) target = $region25
    $region24: #{transformer_encoder_layer.1} parent=1 // pred_region
      %58 = dma.done [#allocation3], 256
    $region25: #{transformer_encoder_layer.1} parent=1 // pred_fallthru
      _
    // Predicated region
    $region26: #{transformer_encoder_layer.1} parent=1 // pred_check
      _
    $region27: #{transformer_encoder_layer.1} parent=1 // pred_check_branch
      %60 = sbr.rel (0) target = $region29
    $region28: #{transformer_encoder_layer.1} parent=1 // pred_region
      %61 = dma.done [#allocation6], 256
    $region29: #{transformer_encoder_layer.1} parent=1 // pred_fallthru
      _
    // Predicated region
    $region30: #{transformer_encoder_layer.1} parent=1 // pred_check
      _
    $region31: #{transformer_encoder_layer.1} parent=1 // pred_check_branch
      %63 = sbr.rel (0) target = $region33
    $region32: #{transformer_encoder_layer.1} parent=1 // pred_region
      %64 = dma.done [#allocation6], 1024
    $region33: #{transformer_encoder_layer.1} parent=1 // pred_fallthru
      _
    %v66 = vld [vmem:[#allocation2] sm:$0xff]
    %v67 = vld [vmem:[#allocation2 + $0x8] sm:$0xff]
    %v68 = vld [vmem:[%s1] sm:$0x1]
    %v69 = vld [vmem:[%s1 + $0x1] sm:$0x1]
    %v70 = vld [vmem:[%s4] sm:$0xff]
    %v71 = vsub.f32 %v68, 1.0
    %v72 = vsub.f32 %v69, 1.0
    %v73 = vmul.f32 %v71, 1e+09
    %v74 = vmul.f32 %v72, 1e+09
    %v75 = vpack.c.bf16 %v67, %v66
    %v76 = vld [vmem:[#allocation5] sm:$0xf]
    %v77 = vld [vmem:[#allocation5 + $0x4] sm:$0xf]
    %v78 = vld [vmem:[#allocation5 + $0x8] sm:$0xf]
    %v79 = vld [vmem:[#allocation5 + $0xc] sm:$0xf]
    %v80 = vlaneseq
    %v81 = vshrl.u32 %v80, 7
    %v82 = vsub.s32 0, %v81
    %v83 = vrot.slane %v70, %v82
    %v88 = vunpack.c.l.b16 %v76
    %v89 = vunpack.c.l.b16 %v77
    %v90 = vunpack.c.l.b16 %v78
    %v91 = vunpack.c.l.b16 %v79
    %v92 = vpack.c.b16 %v89, %v88
    %v93 = vpack.c.b16 %v91, %v90
    %vm96 = vcmask 261120
    %v98 = vsel %vm96, %v75, 0
    %100 = vmatprep.subr.bf16.mxu0 0
    %101 = vmatpush1.bf16.msra.mxu0 %v92
    %102 = vmatprep.subr.bf16.mxu0 0
    %103 = vmatpush1.bf16.msra.mxu0 %v93
    %104 = vmatprep.subr.bf16.mxu0 0
    %105 = vmatpush1.bf16.msra.mxu0 0
    %106 = vmatprep.subr.bf16.mxu0 0
    %107 = vmatpush1.bf16.msra.mxu0 0
    %108 = vmatprep.subr.bf16.mxu0 0
    %109 = vmatpush1.bf16.msra.mxu0 0
    %110 = vmatprep.subr.bf16.mxu0 0
    %111 = vmatpush1.bf16.msra.mxu0 0
    %112 = vmatprep.subr.bf16.mxu0 0
    %113 = vmatpush1.bf16.msra.mxu0 0
    %114 = vmatprep.subr.bf16.mxu0 0
    %115 = vmatpush1.bf16.msra.mxu0 0
    %116 = vmatprep.subr.bf16.mxu0 0
    %117 = vmatpush1.bf16.msra.mxu0 0
    %118 = vmatprep.subr.bf16.mxu0 0
    %119 = vmatpush1.bf16.msra.mxu0 0
    %120 = vmatprep.subr.bf16.mxu0 0
    %121 = vmatpush1.bf16.msra.mxu0 0
    %122 = vmatprep.subr.bf16.mxu0 0
    %123 = vmatpush1.bf16.msra.mxu0 0
    %124 = vmatprep.subr.bf16.mxu0 0
    %125 = vmatpush1.bf16.msra.mxu0 0
    %126 = vmatprep.subr.bf16.mxu0 0
    %127 = vmatpush1.bf16.msra.mxu0 0
    %128 = vmatprep.subr.bf16.mxu0 0
    %129 = vmatpush1.bf16.msra.mxu0 0
    %130 = vmatprep.subr.bf16.mxu0 0
    %131 = vmatpush1.bf16.msra.mxu0 0
    %132 = vmatprep.mubr.bf16.mxu0 0
    %133 = vmatmul.mubr.bf16.gmra.mrb[0].mxu0 %v98
    %v134 = vpop.f32.mrb[0].mxu0
    %v135 = vadd.f32 %v83, %v134
    %v136 = vpop.f32.mrb[0].mxu0
    %v137 = vpop.f32.mrb[0].mxu0
    %v138 = vadd.f32 %v83, %v137
    %v139 = vpop.f32.mrb[0].mxu0
    %140 = vdwg.mxu0
    %v141 = vpack.c.bf16 %v138, %v135
    %v143 = vlaneseq
    %v144 = vshrl.u32 %v143, 7
    %v145 = vsub.s32 0, %v144
    %v146 = vrot.slane %v73, %v145
    %149 = vrot.lane.b32.xlu0 %v141, 96
    %v150 = vpop.permute.xlu0 %149
    %vm151 = vcmask 64512
    %v153 = vsel %vm151, %v141, 0
    %v156 = vsel %vm151, %v150, 0
    %158 = vmatprep.subr.bf16.mxu0 0
    %159 = vmatpush1.bf16.xpose.msra.mxu0 %v156
    %160 = vmatprep.subr.bf16.mxu0 0
    %161 = vmatpush1.bf16.xpose.msra.mxu0 0
    %162 = vmatprep.subr.bf16.mxu0 0
    %163 = vmatpush1.bf16.xpose.msra.mxu0 0
    %164 = vmatprep.subr.bf16.mxu0 0
    %165 = vmatpush1.bf16.xpose.msra.mxu0 0
    %166 = vmatprep.subr.bf16.mxu0 0
    %167 = vmatpush1.bf16.xpose.msra.mxu0 0
    %168 = vmatprep.subr.bf16.mxu0 0
    %169 = vmatpush1.bf16.xpose.msra.mxu0 0
    %170 = vmatprep.subr.bf16.mxu0 0
    %171 = vmatpush1.bf16.xpose.msra.mxu0 0
    %172 = vmatprep.subr.bf16.mxu0 0
    %173 = vmatpush1.bf16.xpose.msra.mxu0 0
    %174 = vmatprep.subr.bf16.mxu0 0
    %175 = vmatpush1.bf16.xpose.msra.mxu0 0
    %176 = vmatprep.subr.bf16.mxu0 0
    %177 = vmatpush1.bf16.xpose.msra.mxu0 0
    %178 = vmatprep.subr.bf16.mxu0 0
    %179 = vmatpush1.bf16.xpose.msra.mxu0 0
    %180 = vmatprep.subr.bf16.mxu0 0
    %181 = vmatpush1.bf16.xpose.msra.mxu0 0
    %182 = vmatprep.subr.bf16.mxu0 0
    %183 = vmatpush1.bf16.xpose.msra.mxu0 0
    %184 = vmatprep.subr.bf16.mxu0 0
    %185 = vmatpush1.bf16.xpose.msra.mxu0 0
    %186 = vmatprep.subr.bf16.mxu0 0
    %187 = vmatpush1.bf16.xpose.msra.mxu0 0
    %188 = vmatprep.subr.bf16.mxu0 0
    %189 = vmatpush1.bf16.xpose.msra.mxu0 0
    %190 = vmatprep.mubr.bf16.mxu0 0
    %191 = vmatmul.mubr.bf16.gmra.mrb[0].mxu0 %v153
    %v192 = vpop.f32.mrb[0].mxu0
    %v193 = vadd.f32 %v146, %v192
    %v194 = vpop.f32.mrb[0].mxu0
    %v195 = vpop.f32.mrb[0].mxu0
    %v196 = vpop.f32.mrb[0].mxu0
    %197 = vdwg.mxu0
    %198 = vrot.lane.b32.xlu0 %v141, 120
    %v199 = vpop.permute.xlu0 %198
    %200 = vrot.lane.b32.xlu0 %v141, 88
    %v201 = vpop.permute.xlu0 %200
    %v203 = vsel %vm151, %v199, 0
    %v206 = vsel %vm151, %v201, 0
    %208 = vmatprep.subr.bf16.mxu0 0
    %209 = vmatpush1.bf16.xpose.msra.mxu0 %v206
    %210 = vmatprep.subr.bf16.mxu0 0
    %211 = vmatpush1.bf16.xpose.msra.mxu0 0
    %212 = vmatprep.subr.bf16.mxu0 0
    %213 = vmatpush1.bf16.xpose.msra.mxu0 0
    %214 = vmatprep.subr.bf16.mxu0 0
    %215 = vmatpush1.bf16.xpose.msra.mxu0 0
    %216 = vmatprep.subr.bf16.mxu0 0
    %217 = vmatpush1.bf16.xpose.msra.mxu0 0
    %218 = vmatprep.subr.bf16.mxu0 0
    %219 = vmatpush1.bf16.xpose.msra.mxu0 0
    %220 = vmatprep.subr.bf16.mxu0 0
    %221 = vmatpush1.bf16.xpose.msra.mxu0 0
    %222 = vmatprep.subr.bf16.mxu0 0
    %223 = vmatpush1.bf16.xpose.msra.mxu0 0
    %224 = vmatprep.subr.bf16.mxu0 0
    %225 = vmatpush1.bf16.xpose.msra.mxu0 0
    %226 = vmatprep.subr.bf16.mxu0 0
    %227 = vmatpush1.bf16.xpose.msra.mxu0 0
    %228 = vmatprep.subr.bf16.mxu0 0
    %229 = vmatpush1.bf16.xpose.msra.mxu0 0
    %230 = vmatprep.subr.bf16.mxu0 0
    %231 = vmatpush1.bf16.xpose.msra.mxu0 0
    %232 = vmatprep.subr.bf16.mxu0 0
    %233 = vmatpush1.bf16.xpose.msra.mxu0 0
    %234 = vmatprep.subr.bf16.mxu0 0
    %235 = vmatpush1.bf16.xpose.msra.mxu0 0
    %236 = vmatprep.subr.bf16.mxu0 0
    %237 = vmatpush1.bf16.xpose.msra.mxu0 0
    %238 = vmatprep.subr.bf16.mxu0 0
    %239 = vmatpush1.bf16.xpose.msra.mxu0 0
    %240 = vmatprep.mubr.bf16.mxu0 0
    %241 = vmatmul.mubr.bf16.gmra.mrb[0].mxu0 %v203
    %v242 = vpop.f32.mrb[0].mxu0
    %v243 = vadd.f32 %v146, %v242
    %v244 = vpop.f32.mrb[0].mxu0
    %v245 = vpop.f32.mrb[0].mxu0
    %v246 = vpop.f32.mrb[0].mxu0
    %247 = vdwg.mxu0
    %248 = vrot.lane.b32.xlu0 %v141, 112
    %v249 = vpop.permute.xlu0 %248
    %250 = vrot.lane.b32.xlu0 %v141, 80
    %v251 = vpop.permute.xlu0 %250
    %v253 = vsel %vm151, %v249, 0
    %v256 = vsel %vm151, %v251, 0
    %258 = vmatprep.subr.bf16.mxu0 0
    %259 = vmatpush1.bf16.xpose.msra.mxu0 %v256
    %260 = vmatprep.subr.bf16.mxu0 0
    %261 = vmatpush1.bf16.xpose.msra.mxu0 0
    %262 = vmatprep.subr.bf16.mxu0 0
    %263 = vmatpush1.bf16.xpose.msra.mxu0 0
    %264 = vmatprep.subr.bf16.mxu0 0
    %265 = vmatpush1.bf16.xpose.msra.mxu0 0
    %266 = vmatprep.subr.bf16.mxu0 0
    %267 = vmatpush1.bf16.xpose.msra.mxu0 0
    %268 = vmatprep.subr.bf16.mxu0 0
    %269 = vmatpush1.bf16.xpose.msra.mxu0 0
    %270 = vmatprep.subr.bf16.mxu0 0
    %271 = vmatpush1.bf16.xpose.msra.mxu0 0
    %272 = vmatprep.subr.bf16.mxu0 0
    %273 = vmatpush1.bf16.xpose.msra.mxu0 0
    %274 = vmatprep.subr.bf16.mxu0 0
    %275 = vmatpush1.bf16.xpose.msra.mxu0 0
    %276 = vmatprep.subr.bf16.mxu0 0
    %277 = vmatpush1.bf16.xpose.msra.mxu0 0
    %278 = vmatprep.subr.bf16.mxu0 0
    %279 = vmatpush1.bf16.xpose.msra.mxu0 0
    %280 = vmatprep.subr.bf16.mxu0 0
    %281 = vmatpush1.bf16.xpose.msra.mxu0 0
    %282 = vmatprep.subr.bf16.mxu0 0
    %283 = vmatpush1.bf16.xpose.msra.mxu0 0
    %284 = vmatprep.subr.bf16.mxu0 0
    %285 = vmatpush1.bf16.xpose.msra.mxu0 0
    %286 = vmatprep.subr.bf16.mxu0 0
    %287 = vmatpush1.bf16.xpose.msra.mxu0 0
    %288 = vmatprep.subr.bf16.mxu0 0
    %289 = vmatpush1.bf16.xpose.msra.mxu0 0
    %290 = vmatprep.mubr.bf16.mxu0 0
    %291 = vmatmul.mubr.bf16.gmra.mrb[0].mxu0 %v253
    %v292 = vpop.f32.mrb[0].mxu0
    %v293 = vadd.f32 %v146, %v292
    %v294 = vpop.f32.mrb[0].mxu0
    %v295 = vpop.f32.mrb[0].mxu0
    %v296 = vpop.f32.mrb[0].mxu0
    %297 = vdwg.mxu0
    %298 = vrot.lane.b32.xlu0 %v141, 104
    %v299 = vpop.permute.xlu0 %298
    %300 = vrot.lane.b32.xlu0 %v141, 72
    %v301 = vpop.permute.xlu0 %300
    %v303 = vsel %vm151, %v299, 0
    %v306 = vsel %vm151, %v301, 0
    %308 = vmatprep.subr.bf16.mxu0 0
    %309 = vmatpush1.bf16.xpose.msra.mxu0 %v306
    %310 = vmatprep.subr.bf16.mxu0 0
    %311 = vmatpush1.bf16.xpose.msra.mxu0 0
    %312 = vmatprep.subr.bf16.mxu0 0
    %313 = vmatpush1.bf16.xpose.msra.mxu0 0
    %314 = vmatprep.subr.bf16.mxu0 0
    %315 = vmatpush1.bf16.xpose.msra.mxu0 0
    %316 = vmatprep.subr.bf16.mxu0 0
    %317 = vmatpush1.bf16.xpose.msra.mxu0 0
    %318 = vmatprep.subr.bf16.mxu0 0
    %319 = vmatpush1.bf16.xpose.msra.mxu0 0
    %320 = vmatprep.subr.bf16.mxu0 0
    %321 = vmatpush1.bf16.xpose.msra.mxu0 0
    %322 = vmatprep.subr.bf16.mxu0 0
    %323 = vmatpush1.bf16.xpose.msra.mxu0 0
    %324 = vmatprep.subr.bf16.mxu0 0
    %325 = vmatpush1.bf16.xpose.msra.mxu0 0
    %326 = vmatprep.subr.bf16.mxu0 0
    %327 = vmatpush1.bf16.xpose.msra.mxu0 0
    %328 = vmatprep.subr.bf16.mxu0 0
    %329 = vmatpush1.bf16.xpose.msra.mxu0 0
    %330 = vmatprep.subr.bf16.mxu0 0
    %331 = vmatpush1.bf16.xpose.msra.mxu0 0
    %332 = vmatprep.subr.bf16.mxu0 0
    %333 = vmatpush1.bf16.xpose.msra.mxu0 0
    %334 = vmatprep.subr.bf16.mxu0 0
    %335 = vmatpush1.bf16.xpose.msra.mxu0 0
    %336 = vmatprep.subr.bf16.mxu0 0
    %337 = vmatpush1.bf16.xpose.msra.mxu0 0
    %338 = vmatprep.subr.bf16.mxu0 0
    %339 = vmatpush1.bf16.xpose.msra.mxu0 0
    %340 = vmatprep.mubr.bf16.mxu0 0
    %341 = vmatmul.mubr.bf16.gmra.mrb[0].mxu0 %v303
    %v342 = vpop.f32.mrb[0].mxu0
    %v343 = vadd.f32 %v146, %v342
    %v344 = vpop.f32.mrb[0].mxu0
    %v345 = vpop.f32.mrb[0].mxu0
    %v346 = vpop.f32.mrb[0].mxu0
    %347 = vdwg.mxu0
    %v349 = vlaneseq
    %v350 = vshrl.u32 %v349, 7
    %v351 = vsub.s32 0, %v350
    %v352 = vrot.slane %v74, %v351
    %v354 = vrot.slane %v141, 4
    %355 = vrot.lane.b32.xlu0 %v354, 96
    %v356 = vpop.permute.xlu0 %355
    %v358 = vsel %vm151, %v354, 0
    %v361 = vsel %vm151, %v356, 0
    %363 = vmatprep.subr.bf16.mxu0 0
    %364 = vmatpush1.bf16.xpose.msra.mxu0 %v361
    %365 = vmatprep.subr.bf16.mxu0 0
    %366 = vmatpush1.bf16.xpose.msra.mxu0 0
    %367 = vmatprep.subr.bf16.mxu0 0
    %368 = vmatpush1.bf16.xpose.msra.mxu0 0
    %369 = vmatprep.subr.bf16.mxu0 0
    %370 = vmatpush1.bf16.xpose.msra.mxu0 0
    %371 = vmatprep.subr.bf16.mxu0 0
    %372 = vmatpush1.bf16.xpose.msra.mxu0 0
    %373 = vmatprep.subr.bf16.mxu0 0
    %374 = vmatpush1.bf16.xpose.msra.mxu0 0
    %375 = vmatprep.subr.bf16.mxu0 0
    %376 = vmatpush1.bf16.xpose.msra.mxu0 0
    %377 = vmatprep.subr.bf16.mxu0 0
    %378 = vmatpush1.bf16.xpose.msra.mxu0 0
    %379 = vmatprep.subr.bf16.mxu0 0
    %380 = vmatpush1.bf16.xpose.msra.mxu0 0
    %381 = vmatprep.subr.bf16.mxu0 0
    %382 = vmatpush1.bf16.xpose.msra.mxu0 0
    %383 = vmatprep.subr.bf16.mxu0 0
    %384 = vmatpush1.bf16.xpose.msra.mxu0 0
    %385 = vmatprep.subr.bf16.mxu0 0
    %386 = vmatpush1.bf16.xpose.msra.mxu0 0
    %387 = vmatprep.subr.bf16.mxu0 0
    %388 = vmatpush1.bf16.xpose.msra.mxu0 0
    %389 = vmatprep.subr.bf16.mxu0 0
    %390 = vmatpush1.bf16.xpose.msra.mxu0 0
    %391 = vmatprep.subr.bf16.mxu0 0
    %392 = vmatpush1.bf16.xpose.msra.mxu0 0
    %393 = vmatprep.subr.bf16.mxu0 0
    %394 = vmatpush1.bf16.xpose.msra.mxu0 0
    %395 = vmatprep.mubr.bf16.mxu0 0
    %396 = vmatmul.mubr.bf16.gmra.mrb[0].mxu0 %v358
    %v397 = vpop.f32.mrb[0].mxu0
    %v398 = vadd.f32 %v352, %v397
    %v399 = vpop.f32.mrb[0].mxu0
    %v400 = vpop.f32.mrb[0].mxu0
    %v401 = vpop.f32.mrb[0].mxu0
    %402 = vdwg.mxu0
    %403 = vrot.lane.b32.xlu0 %v354, 120
    %v404 = vpop.permute.xlu0 %403
    %405 = vrot.lane.b32.xlu0 %v354, 88
    %v406 = vpop.permute.xlu0 %405
    %v408 = vsel %vm151, %v404, 0
    %v411 = vsel %vm151, %v406, 0
    %413 = vmatprep.subr.bf16.mxu0 0
    %414 = vmatpush1.bf16.xpose.msra.mxu0 %v411
    %415 = vmatprep.subr.bf16.mxu0 0
    %416 = vmatpush1.bf16.xpose.msra.mxu0 0
    %417 = vmatprep.subr.bf16.mxu0 0
    %418 = vmatpush1.bf16.xpose.msra.mxu0 0
    %419 = vmatprep.subr.bf16.mxu0 0
    %420 = vmatpush1.bf16.xpose.msra.mxu0 0
    %421 = vmatprep.subr.bf16.mxu0 0
    %422 = vmatpush1.bf16.xpose.msra.mxu0 0
    %423 = vmatprep.subr.bf16.mxu0 0
    %424 = vmatpush1.bf16.xpose.msra.mxu0 0
    %425 = vmatprep.subr.bf16.mxu0 0
    %426 = vmatpush1.bf16.xpose.msra.mxu0 0
    %427 = vmatprep.subr.bf16.mxu0 0
    %428 = vmatpush1.bf16.xpose.msra.mxu0 0
    %429 = vmatprep.subr.bf16.mxu0 0
    %430 = vmatpush1.bf16.xpose.msra.mxu0 0
    %431 = vmatprep.subr.bf16.mxu0 0
    %432 = vmatpush1.bf16.xpose.msra.mxu0 0
    %433 = vmatprep.subr.bf16.mxu0 0
    %434 = vmatpush1.bf16.xpose.msra.mxu0 0
    %435 = vmatprep.subr.bf16.mxu0 0
    %436 = vmatpush1.bf16.xpose.msra.mxu0 0
    %437 = vmatprep.subr.bf16.mxu0 0
    %438 = vmatpush1.bf16.xpose.msra.mxu0 0
    %439 = vmatprep.subr.bf16.mxu0 0
    %440 = vmatpush1.bf16.xpose.msra.mxu0 0
    %441 = vmatprep.subr.bf16.mxu0 0
    %442 = vmatpush1.bf16.xpose.msra.mxu0 0
    %443 = vmatprep.subr.bf16.mxu0 0
    %444 = vmatpush1.bf16.xpose.msra.mxu0 0
    %445 = vmatprep.mubr.bf16.mxu0 0
    %446 = vmatmul.mubr.bf16.gmra.mrb[0].mxu0 %v408
    %v447 = vpop.f32.mrb[0].mxu0
    %v448 = vadd.f32 %v352, %v447
    %v449 = vpop.f32.mrb[0].mxu0
    %v450 = vpop.f32.mrb[0].mxu0
    %v451 = vpop.f32.mrb[0].mxu0
    %452 = vdwg.mxu0
    %453 = vrot.lane.b32.xlu0 %v354, 112
    %v454 = vpop.permute.xlu0 %453
    %455 = vrot.lane.b32.xlu0 %v354, 80
    %v456 = vpop.permute.xlu0 %455
    %v458 = vsel %vm151, %v454, 0
    %v461 = vsel %vm151, %v456, 0
    %463 = vmatprep.subr.bf16.mxu0 0
    %464 = vmatpush1.bf16.xpose.msra.mxu0 %v461
    %465 = vmatprep.subr.bf16.mxu0 0
    %466 = vmatpush1.bf16.xpose.msra.mxu0 0
    %467 = vmatprep.subr.bf16.mxu0 0
    %468 = vmatpush1.bf16.xpose.msra.mxu0 0
    %469 = vmatprep.subr.bf16.mxu0 0
    %470 = vmatpush1.bf16.xpose.msra.mxu0 0
    %471 = vmatprep.subr.bf16.mxu0 0
    %472 = vmatpush1.bf16.xpose.msra.mxu0 0
    %473 = vmatprep.subr.bf16.mxu0 0
    %474 = vmatpush1.bf16.xpose.msra.mxu0 0
    %475 = vmatprep.subr.bf16.mxu0 0
    %476 = vmatpush1.bf16.xpose.msra.mxu0 0
    %477 = vmatprep.subr.bf16.mxu0 0
    %478 = vmatpush1.bf16.xpose.msra.mxu0 0
    %479 = vmatprep.subr.bf16.mxu0 0
    %480 = vmatpush1.bf16.xpose.msra.mxu0 0
    %481 = vmatprep.subr.bf16.mxu0 0
    %482 = vmatpush1.bf16.xpose.msra.mxu0 0
    %483 = vmatprep.subr.bf16.mxu0 0
    %484 = vmatpush1.bf16.xpose.msra.mxu0 0
    %485 = vmatprep.subr.bf16.mxu0 0
    %486 = vmatpush1.bf16.xpose.msra.mxu0 0
    %487 = vmatprep.subr.bf16.mxu0 0
    %488 = vmatpush1.bf16.xpose.msra.mxu0 0
    %489 = vmatprep.subr.bf16.mxu0 0
    %490 = vmatpush1.bf16.xpose.msra.mxu0 0
    %491 = vmatprep.subr.bf16.mxu0 0
    %492 = vmatpush1.bf16.xpose.msra.mxu0 0
    %493 = vmatprep.subr.bf16.mxu0 0
    %494 = vmatpush1.bf16.xpose.msra.mxu0 0
    %495 = vmatprep.mubr.bf16.mxu0 0
    %496 = vmatmul.mubr.bf16.gmra.mrb[0].mxu0 %v458
    %v497 = vpop.f32.mrb[0].mxu0
    %v498 = vadd.f32 %v352, %v497
    %v499 = vpop.f32.mrb[0].mxu0
    %v500 = vpop.f32.mrb[0].mxu0
    %v501 = vpop.f32.mrb[0].mxu0
    %502 = vdwg.mxu0
    %503 = vrot.lane.b32.xlu0 %v354, 104
    %v504 = vpop.permute.xlu0 %503
    %505 = vrot.lane.b32.xlu0 %v354, 72
    %v506 = vpop.permute.xlu0 %505
    %v508 = vsel %vm151, %v504, 0
    %v511 = vsel %vm151, %v506, 0
    %513 = vmatprep.subr.bf16.mxu0 0
    %514 = vmatpush1.bf16.xpose.msra.mxu0 %v511
    %515 = vmatprep.subr.bf16.mxu0 0
    %516 = vmatpush1.bf16.xpose.msra.mxu0 0
    %517 = vmatprep.subr.bf16.mxu0 0
    %518 = vmatpush1.bf16.xpose.msra.mxu0 0
    %519 = vmatprep.subr.bf16.mxu0 0
    %520 = vmatpush1.bf16.xpose.msra.mxu0 0
    %521 = vmatprep.subr.bf16.mxu0 0
    %522 = vmatpush1.bf16.xpose.msra.mxu0 0
    %523 = vmatprep.subr.bf16.mxu0 0
    %524 = vmatpush1.bf16.xpose.msra.mxu0 0
    %525 = vmatprep.subr.bf16.mxu0 0
    %526 = vmatpush1.bf16.xpose.msra.mxu0 0
    %527 = vmatprep.subr.bf16.mxu0 0
    %528 = vmatpush1.bf16.xpose.msra.mxu0 0
    %529 = vmatprep.subr.bf16.mxu0 0
    %530 = vmatpush1.bf16.xpose.msra.mxu0 0
    %531 = vmatprep.subr.bf16.mxu0 0
    %532 = vmatpush1.bf16.xpose.msra.mxu0 0
    %533 = vmatprep.subr.bf16.mxu0 0
    %534 = vmatpush1.bf16.xpose.msra.mxu0 0
    %535 = vmatprep.subr.bf16.mxu0 0
    %536 = vmatpush1.bf16.xpose.msra.mxu0 0
    %537 = vmatprep.subr.bf16.mxu0 0
    %538 = vmatpush1.bf16.xpose.msra.mxu0 0
    %539 = vmatprep.subr.bf16.mxu0 0
    %540 = vmatpush1.bf16.xpose.msra.mxu0 0
    %541 = vmatprep.subr.bf16.mxu0 0
    %542 = vmatpush1.bf16.xpose.msra.mxu0 0
    %543 = vmatprep.subr.bf16.mxu0 0
    %544 = vmatpush1.bf16.xpose.msra.mxu0 0
    %545 = vmatprep.mubr.bf16.mxu0 0
    %546 = vmatmul.mubr.bf16.gmra.mrb[0].mxu0 %v508
    %v547 = vpop.f32.mrb[0].mxu0
    %v548 = vadd.f32 %v352, %v547
    %v549 = vpop.f32.mrb[0].mxu0
    %v550 = vpop.f32.mrb[0].mxu0
    %v551 = vpop.f32.mrb[0].mxu0
    %552 = vdwg.mxu0
    %v553 = vsel %vm151, %v193, -inf
    %554 = vmax.xlane.f32.xlu0 %v553
    %v555 = vpop.xlane.xlu0 %554
    %v556 = vsel %vm151, %v243, -inf
    %557 = vmax.xlane.f32.xlu0 %v556
    %v558 = vpop.xlane.xlu0 %557
    %v559 = vsel %vm151, %v293, -inf
    %560 = vmax.xlane.f32.xlu0 %v559
    %v561 = vpop.xlane.xlu0 %560
    %v562 = vsel %vm151, %v343, -inf
    %563 = vmax.xlane.f32.xlu0 %v562
    %v564 = vpop.xlane.xlu0 %563
    %v565 = vsel %vm151, %v398, -inf
    %566 = vmax.xlane.f32.xlu0 %v565
    %v567 = vpop.xlane.xlu0 %566
    %v568 = vsel %vm151, %v448, -inf
    %569 = vmax.xlane.f32.xlu0 %v568
    %v570 = vpop.xlane.xlu0 %569
    %v571 = vsel %vm151, %v498, -inf
    %572 = vmax.xlane.f32.xlu0 %v571
    %v573 = vpop.xlane.xlu0 %572
    %v574 = vsel %vm151, %v548, -inf
    %575 = vmax.xlane.f32.xlu0 %v574
    %v576 = vpop.xlane.xlu0 %575
    %v577 = vsub.f32 %v193, %v555
    %v578 = vsub.f32 %v243, %v558
    %v579 = vsub.f32 %v293, %v561
    %v580 = vsub.f32 %v343, %v564
    %v581 = vsub.f32 %v398, %v567
    %v582 = vsub.f32 %v448, %v570
    %v583 = vsub.f32 %v498, %v573
    %v584 = vsub.f32 %v548, %v576
    %v585 = vmul.f32 %v577, 1.442695
    %v586 = vpow.pop %v585
    %v587 = vmul.f32 %v578, 1.442695
    %v588 = vpow.pop %v587
    %v589 = vmul.f32 %v579, 1.442695
    %v590 = vpow.pop %v589
    %v591 = vmul.f32 %v580, 1.442695
    %v592 = vpow.pop %v591
    %v593 = vmul.f32 %v581, 1.442695
    %v594 = vpow.pop %v593
    %v595 = vmul.f32 %v582, 1.442695
    %v596 = vpow.pop %v595
    %v597 = vmul.f32 %v583, 1.442695
    %v598 = vpow.pop %v597
    %v599 = vmul.f32 %v584, 1.442695
    %v600 = vpow.pop %v599
    %v601 = vsel %vm151, %v586, 0.0
    %602 = vadd.xlane.f32.xlu0 %v601
    %v603 = vpop.xlane.xlu0 %602
    %v604 = vsel %vm151, %v588, 0.0
    %605 = vadd.xlane.f32.xlu0 %v604
    %v606 = vpop.xlane.xlu0 %605
    %v607 = vsel %vm151, %v590, 0.0
    %608 = vadd.xlane.f32.xlu0 %v607
    %v609 = vpop.xlane.xlu0 %608
    %v610 = vsel %vm151, %v592, 0.0
    %611 = vadd.xlane.f32.xlu0 %v610
    %v612 = vpop.xlane.xlu0 %611
    %v613 = vsel %vm151, %v594, 0.0
    %614 = vadd.xlane.f32.xlu0 %v613
    %v615 = vpop.xlane.xlu0 %614
    %v616 = vsel %vm151, %v596, 0.0
    %617 = vadd.xlane.f32.xlu0 %v616
    %v618 = vpop.xlane.xlu0 %617
    %v619 = vsel %vm151, %v598, 0.0
    %620 = vadd.xlane.f32.xlu0 %v619
    %v621 = vpop.xlane.xlu0 %620
    %v622 = vsel %vm151, %v600, 0.0
    %623 = vadd.xlane.f32.xlu0 %v622
    %v624 = vpop.xlane.xlu0 %623
    %v625 = vrcp.pop %v603
    %v626 = vrcp.pop %v606
    %v627 = vrcp.pop %v609
    %v628 = vrcp.pop %v612
    %v629 = vrcp.pop %v615
    %v630 = vrcp.pop %v618
    %v631 = vrcp.pop %v621
    %v632 = vrcp.pop %v624
    %v633 = vmul.f32 %v586, %v625
    %v634 = vmul.f32 %v588, %v626
    %v635 = vmul.f32 %v590, %v627
    %v636 = vmul.f32 %v592, %v628
    %v637 = vmul.f32 %v594, %v629
    %v638 = vmul.f32 %v596, %v630
    %v639 = vmul.f32 %v598, %v631
    %v640 = vmul.f32 %v600, %v632
    %641 = vst.msk [vmem:[#allocation9] sm:$0xff] %vm151, %v633
    %642 = vst.msk [vmem:[#allocation9 + $0x8] sm:$0xff] %vm151, %v634
    %643 = vst.msk [vmem:[#allocation9 + $0x10] sm:$0xff] %vm151, %v635
    %644 = vst.msk [vmem:[#allocation9 + $0x18] sm:$0xff] %vm151, %v636
    %645 = vst.msk [vmem:[#allocation9 + $0x20] sm:$0xff] %vm151, %v637
    %646 = vst.msk [vmem:[#allocation9 + $0x28] sm:$0xff] %vm151, %v638
    %647 = vst.msk [vmem:[#allocation9 + $0x30] sm:$0xff] %vm151, %v639
    %648 = vst.msk [vmem:[#allocation9 + $0x38] sm:$0xff] %vm151, %v640
    %v649 = vpack.c.bf16 %v634, %v633
    %v650 = vpack.c.bf16 %v636, %v635
    %v651 = vpack.c.bf16 %v638, %v637
    %v652 = vpack.c.bf16 %v640, %v639
    %653 = vrot.lane.b32.xlu0 %v141, 64
    %v654 = vpop.permute.xlu0 %653
    %v656 = vsel %vm151, %v649, 0
    %vm658 = vcmask 1043456
    %v660 = vsel %vm658, %v654, 0
    %662 = vmatprep.subr.bf16.mxu0 0
    %663 = vmatpush1.bf16.msra.mxu0 %v660
    %664 = vmatprep.subr.bf16.mxu0 0
    %665 = vmatpush1.bf16.msra.mxu0 0
    %666 = vmatprep.subr.bf16.mxu0 0
    %667 = vmatpush1.bf16.msra.mxu0 0
    %668 = vmatprep.subr.bf16.mxu0 0
    %669 = vmatpush1.bf16.msra.mxu0 0
    %670 = vmatprep.subr.bf16.mxu0 0
    %671 = vmatpush1.bf16.msra.mxu0 0
    %672 = vmatprep.subr.bf16.mxu0 0
    %673 = vmatpush1.bf16.msra.mxu0 0
    %674 = vmatprep.subr.bf16.mxu0 0
    %675 = vmatpush1.bf16.msra.mxu0 0
    %676 = vmatprep.subr.bf16.mxu0 0
    %677 = vmatpush1.bf16.msra.mxu0 0
    %678 = vmatprep.subr.bf16.mxu0 0
    %679 = vmatpush1.bf16.msra.mxu0 0
    %680 = vmatprep.subr.bf16.mxu0 0
    %681 = vmatpush1.bf16.msra.mxu0 0
    %682 = vmatprep.subr.bf16.mxu0 0
    %683 = vmatpush1.bf16.msra.mxu0 0
    %684 = vmatprep.subr.bf16.mxu0 0
    %685 = vmatpush1.bf16.msra.mxu0 0
    %686 = vmatprep.subr.bf16.mxu0 0
    %687 = vmatpush1.bf16.msra.mxu0 0
    %688 = vmatprep.subr.bf16.mxu0 0
    %689 = vmatpush1.bf16.msra.mxu0 0
    %690 = vmatprep.subr.bf16.mxu0 0
    %691 = vmatpush1.bf16.msra.mxu0 0
    %692 = vmatprep.subr.bf16.mxu0 0
    %693 = vmatpush1.bf16.msra.mxu0 0
    %694 = vmatprep.mubr.bf16.mxu0 0
    %695 = vmatmul.mubr.bf16.gmra.mrb[0].mxu0 %v656
    %v696 = vpop.f32.mrb[0].mxu0
    %v697 = vadd.f32 0.0, %v696
    %v698 = vpop.f32.mrb[0].mxu0
    %v699 = vpop.f32.mrb[0].mxu0
    %v700 = vpop.f32.mrb[0].mxu0
    %701 = vdwg.mxu0
    %v703 = vrot.slane %v649, 4
    %704 = vrot.lane.b32.xlu0 %v141, 56
    %v705 = vpop.permute.xlu0 %704
    %v707 = vsel %vm151, %v703, 0
    %v710 = vsel %vm658, %v705, 0
    %712 = vmatprep.subr.bf16.mxu0 0
    %713 = vmatpush1.bf16.msra.mxu0 %v710
    %714 = vmatprep.subr.bf16.mxu0 0
    %715 = vmatpush1.bf16.msra.mxu0 0
    %716 = vmatprep.subr.bf16.mxu0 0
    %717 = vmatpush1.bf16.msra.mxu0 0
    %718 = vmatprep.subr.bf16.mxu0 0
    %719 = vmatpush1.bf16.msra.mxu0 0
    %720 = vmatprep.subr.bf16.mxu0 0
    %721 = vmatpush1.bf16.msra.mxu0 0
    %722 = vmatprep.subr.bf16.mxu0 0
    %723 = vmatpush1.bf16.msra.mxu0 0
    %724 = vmatprep.subr.bf16.mxu0 0
    %725 = vmatpush1.bf16.msra.mxu0 0
    %726 = vmatprep.subr.bf16.mxu0 0
    %727 = vmatpush1.bf16.msra.mxu0 0
    %728 = vmatprep.subr.bf16.mxu0 0
    %729 = vmatpush1.bf16.msra.mxu0 0
    %730 = vmatprep.subr.bf16.mxu0 0
    %731 = vmatpush1.bf16.msra.mxu0 0
    %732 = vmatprep.subr.bf16.mxu0 0
    %733 = vmatpush1.bf16.msra.mxu0 0
    %734 = vmatprep.subr.bf16.mxu0 0
    %735 = vmatpush1.bf16.msra.mxu0 0
    %736 = vmatprep.subr.bf16.mxu0 0
    %737 = vmatpush1.bf16.msra.mxu0 0
    %738 = vmatprep.subr.bf16.mxu0 0
    %739 = vmatpush1.bf16.msra.mxu0 0
    %740 = vmatprep.subr.bf16.mxu0 0
    %741 = vmatpush1.bf16.msra.mxu0 0
    %742 = vmatprep.subr.bf16.mxu0 0
    %743 = vmatpush1.bf16.msra.mxu0 0
    %744 = vmatprep.mubr.bf16.mxu0 0
    %745 = vmatmul.mubr.bf16.gmra.mrb[0].mxu0 %v707
    %v746 = vpop.f32.mrb[0].mxu0
    %v747 = vadd.f32 0.0, %v746
    %v748 = vpop.f32.mrb[0].mxu0
    %v749 = vpop.f32.mrb[0].mxu0
    %v750 = vpop.f32.mrb[0].mxu0
    %751 = vdwg.mxu0
    %752 = vrot.lane.b32.xlu0 %v141, 48
    %v753 = vpop.permute.xlu0 %752
    %v755 = vsel %vm151, %v650, 0
    %v758 = vsel %vm658, %v753, 0
    %760 = vmatprep.subr.bf16.mxu0 0
    %761 = vmatpush1.bf16.msra.mxu0 %v758
    %762 = vmatprep.subr.bf16.mxu0 0
    %763 = vmatpush1.bf16.msra.mxu0 0
    %764 = vmatprep.subr.bf16.mxu0 0
    %765 = vmatpush1.bf16.msra.mxu0 0
    %766 = vmatprep.subr.bf16.mxu0 0
    %767 = vmatpush1.bf16.msra.mxu0 0
    %768 = vmatprep.subr.bf16.mxu0 0
    %769 = vmatpush1.bf16.msra.mxu0 0
    %770 = vmatprep.subr.bf16.mxu0 0
    %771 = vmatpush1.bf16.msra.mxu0 0
    %772 = vmatprep.subr.bf16.mxu0 0
    %773 = vmatpush1.bf16.msra.mxu0 0
    %774 = vmatprep.subr.bf16.mxu0 0
    %775 = vmatpush1.bf16.msra.mxu0 0
    %776 = vmatprep.subr.bf16.mxu0 0
    %777 = vmatpush1.bf16.msra.mxu0 0
    %778 = vmatprep.subr.bf16.mxu0 0
    %779 = vmatpush1.bf16.msra.mxu0 0
    %780 = vmatprep.subr.bf16.mxu0 0
    %781 = vmatpush1.bf16.msra.mxu0 0
    %782 = vmatprep.subr.bf16.mxu0 0
    %783 = vmatpush1.bf16.msra.mxu0 0
    %784 = vmatprep.subr.bf16.mxu0 0
    %785 = vmatpush1.bf16.msra.mxu0 0
    %786 = vmatprep.subr.bf16.mxu0 0
    %787 = vmatpush1.bf16.msra.mxu0 0
    %788 = vmatprep.subr.bf16.mxu0 0
    %789 = vmatpush1.bf16.msra.mxu0 0
    %790 = vmatprep.subr.bf16.mxu0 0
    %791 = vmatpush1.bf16.msra.mxu0 0
    %792 = vmatprep.mubr.bf16.mxu0 0
    %793 = vmatmul.mubr.bf16.gmra.mrb[0].mxu0 %v755
    %v794 = vpop.f32.mrb[0].mxu0
    %v795 = vadd.f32 0.0, %v794
    %v796 = vpop.f32.mrb[0].mxu0
    %v797 = vpop.f32.mrb[0].mxu0
    %v798 = vpop.f32.mrb[0].mxu0
    %799 = vdwg.mxu0
    %v801 = vrot.slane %v650, 4
    %802 = vrot.lane.b32.xlu0 %v141, 40
    %v803 = vpop.permute.xlu0 %802
    %v805 = vsel %vm151, %v801, 0
    %v808 = vsel %vm658, %v803, 0
    %810 = vmatprep.subr.bf16.mxu0 0
    %811 = vmatpush1.bf16.msra.mxu0 %v808
    %812 = vmatprep.subr.bf16.mxu0 0
    %813 = vmatpush1.bf16.msra.mxu0 0
    %814 = vmatprep.subr.bf16.mxu0 0
    %815 = vmatpush1.bf16.msra.mxu0 0
    %816 = vmatprep.subr.bf16.mxu0 0
    %817 = vmatpush1.bf16.msra.mxu0 0
    %818 = vmatprep.subr.bf16.mxu0 0
    %819 = vmatpush1.bf16.msra.mxu0 0
    %820 = vmatprep.subr.bf16.mxu0 0
    %821 = vmatpush1.bf16.msra.mxu0 0
    %822 = vmatprep.subr.bf16.mxu0 0
    %823 = vmatpush1.bf16.msra.mxu0 0
    %824 = vmatprep.subr.bf16.mxu0 0
    %825 = vmatpush1.bf16.msra.mxu0 0
    %826 = vmatprep.subr.bf16.mxu0 0
    %827 = vmatpush1.bf16.msra.mxu0 0
    %828 = vmatprep.subr.bf16.mxu0 0
    %829 = vmatpush1.bf16.msra.mxu0 0
    %830 = vmatprep.subr.bf16.mxu0 0
    %831 = vmatpush1.bf16.msra.mxu0 0
    %832 = vmatprep.subr.bf16.mxu0 0
    %833 = vmatpush1.bf16.msra.mxu0 0
    %834 = vmatprep.subr.bf16.mxu0 0
    %835 = vmatpush1.bf16.msra.mxu0 0
    %836 = vmatprep.subr.bf16.mxu0 0
    %837 = vmatpush1.bf16.msra.mxu0 0
    %838 = vmatprep.subr.bf16.mxu0 0
    %839 = vmatpush1.bf16.msra.mxu0 0
    %840 = vmatprep.subr.bf16.mxu0 0
    %841 = vmatpush1.bf16.msra.mxu0 0
    %842 = vmatprep.mubr.bf16.mxu0 0
    %843 = vmatmul.mubr.bf16.gmra.mrb[0].mxu0 %v805
    %v844 = vpop.f32.mrb[0].mxu0
    %v845 = vadd.f32 0.0, %v844
    %v846 = vpop.f32.mrb[0].mxu0
    %v847 = vpop.f32.mrb[0].mxu0
    %v848 = vpop.f32.mrb[0].mxu0
    %849 = vdwg.mxu0
    %851 = vrot.lane.b32.xlu0 %v747, 8
    %v852 = vpop.permute.xlu0 %851
    %855 = vrot.lane.b32.xlu0 %v795, 16
    %v856 = vpop.permute.xlu0 %855
    %859 = vrot.lane.b32.xlu0 %v845, 24
    %v860 = vpop.permute.xlu0 %859
    %v862 = vsel %vm151, %v697, %v852
    %vm863 = vcmask 130048
    %v864 = vsel %vm863, %v862, %v856
    %vm865 = vcmask 195584
    %v866 = vsel %vm865, %v864, %v860
    %867 = vrot.lane.b32.xlu0 %v354, 64
    %v868 = vpop.permute.xlu0 %867
    %v870 = vsel %vm151, %v651, 0
    %v873 = vsel %vm658, %v868, 0
    %875 = vmatprep.subr.bf16.mxu0 0
    %876 = vmatpush1.bf16.msra.mxu0 %v873
    %877 = vmatprep.subr.bf16.mxu0 0
    %878 = vmatpush1.bf16.msra.mxu0 0
    %879 = vmatprep.subr.bf16.mxu0 0
    %880 = vmatpush1.bf16.msra.mxu0 0
    %881 = vmatprep.subr.bf16.mxu0 0
    %882 = vmatpush1.bf16.msra.mxu0 0
    %883 = vmatprep.subr.bf16.mxu0 0
    %884 = vmatpush1.bf16.msra.mxu0 0
    %885 = vmatprep.subr.bf16.mxu0 0
    %886 = vmatpush1.bf16.msra.mxu0 0
    %887 = vmatprep.subr.bf16.mxu0 0
    %888 = vmatpush1.bf16.msra.mxu0 0
    %889 = vmatprep.subr.bf16.mxu0 0
    %890 = vmatpush1.bf16.msra.mxu0 0
    %891 = vmatprep.subr.bf16.mxu0 0
    %892 = vmatpush1.bf16.msra.mxu0 0
    %893 = vmatprep.subr.bf16.mxu0 0
    %894 = vmatpush1.bf16.msra.mxu0 0
    %895 = vmatprep.subr.bf16.mxu0 0
    %896 = vmatpush1.bf16.msra.mxu0 0
    %897 = vmatprep.subr.bf16.mxu0 0
    %898 = vmatpush1.bf16.msra.mxu0 0
    %899 = vmatprep.subr.bf16.mxu0 0
    %900 = vmatpush1.bf16.msra.mxu0 0
    %901 = vmatprep.subr.bf16.mxu0 0
    %902 = vmatpush1.bf16.msra.mxu0 0
    %903 = vmatprep.subr.bf16.mxu0 0
    %904 = vmatpush1.bf16.msra.mxu0 0
    %905 = vmatprep.subr.bf16.mxu0 0
    %906 = vmatpush1.bf16.msra.mxu0 0
    %907 = vmatprep.mubr.bf16.mxu0 0
    %908 = vmatmul.mubr.bf16.gmra.mrb[0].mxu0 %v870
    %v909 = vpop.f32.mrb[0].mxu0
    %v910 = vadd.f32 0.0, %v909
    %v911 = vpop.f32.mrb[0].mxu0
    %v912 = vpop.f32.mrb[0].mxu0
    %v913 = vpop.f32.mrb[0].mxu0
    %914 = vdwg.mxu0
    %v916 = vrot.slane %v651, 4
    %917 = vrot.lane.b32.xlu0 %v354, 56
    %v918 = vpop.permute.xlu0 %917
    %v920 = vsel %vm151, %v916, 0
    %v923 = vsel %vm658, %v918, 0
    %925 = vmatprep.subr.bf16.mxu0 0
    %926 = vmatpush1.bf16.msra.mxu0 %v923
    %927 = vmatprep.subr.bf16.mxu0 0
    %928 = vmatpush1.bf16.msra.mxu0 0
    %929 = vmatprep.subr.bf16.mxu0 0
    %930 = vmatpush1.bf16.msra.mxu0 0
    %931 = vmatprep.subr.bf16.mxu0 0
    %932 = vmatpush1.bf16.msra.mxu0 0
    %933 = vmatprep.subr.bf16.mxu0 0
    %934 = vmatpush1.bf16.msra.mxu0 0
    %935 = vmatprep.subr.bf16.mxu0 0
    %936 = vmatpush1.bf16.msra.mxu0 0
    %937 = vmatprep.subr.bf16.mxu0 0
    %938 = vmatpush1.bf16.msra.mxu0 0
    %939 = vmatprep.subr.bf16.mxu0 0
    %940 = vmatpush1.bf16.msra.mxu0 0
    %941 = vmatprep.subr.bf16.mxu0 0
    %942 = vmatpush1.bf16.msra.mxu0 0
    %943 = vmatprep.subr.bf16.mxu0 0
    %944 = vmatpush1.bf16.msra.mxu0 0
    %945 = vmatprep.subr.bf16.mxu0 0
    %946 = vmatpush1.bf16.msra.mxu0 0
    %947 = vmatprep.subr.bf16.mxu0 0
    %948 = vmatpush1.bf16.msra.mxu0 0
    %949 = vmatprep.subr.bf16.mxu0 0
    %950 = vmatpush1.bf16.msra.mxu0 0
    %951 = vmatprep.subr.bf16.mxu0 0
    %952 = vmatpush1.bf16.msra.mxu0 0
    %953 = vmatprep.subr.bf16.mxu0 0
    %954 = vmatpush1.bf16.msra.mxu0 0
    %955 = vmatprep.subr.bf16.mxu0 0
    %956 = vmatpush1.bf16.msra.mxu0 0
    %957 = vmatprep.mubr.bf16.mxu0 0
    %958 = vmatmul.mubr.bf16.gmra.mrb[0].mxu0 %v920
    %v959 = vpop.f32.mrb[0].mxu0
    %v960 = vadd.f32 0.0, %v959
    %v961 = vpop.f32.mrb[0].mxu0
    %v962 = vpop.f32.mrb[0].mxu0
    %v963 = vpop.f32.mrb[0].mxu0
    %964 = vdwg.mxu0
    %965 = vrot.lane.b32.xlu0 %v354, 48
    %v966 = vpop.permute.xlu0 %965
    %v968 = vsel %vm151, %v652, 0
    %v971 = vsel %vm658, %v966, 0
    %973 = vmatprep.subr.bf16.mxu0 0
    %974 = vmatpush1.bf16.msra.mxu0 %v971
    %975 = vmatprep.subr.bf16.mxu0 0
    %976 = vmatpush1.bf16.msra.mxu0 0
    %977 = vmatprep.subr.bf16.mxu0 0
    %978 = vmatpush1.bf16.msra.mxu0 0
    %979 = vmatprep.subr.bf16.mxu0 0
    %980 = vmatpush1.bf16.msra.mxu0 0
    %981 = vmatprep.subr.bf16.mxu0 0
    %982 = vmatpush1.bf16.msra.mxu0 0
    %983 = vmatprep.subr.bf16.mxu0 0
    %984 = vmatpush1.bf16.msra.mxu0 0
    %985 = vmatprep.subr.bf16.mxu0 0
    %986 = vmatpush1.bf16.msra.mxu0 0
    %987 = vmatprep.subr.bf16.mxu0 0
    %988 = vmatpush1.bf16.msra.mxu0 0
    %989 = vmatprep.subr.bf16.mxu0 0
    %990 = vmatpush1.bf16.msra.mxu0 0
    %991 = vmatprep.subr.bf16.mxu0 0
    %992 = vmatpush1.bf16.msra.mxu0 0
    %993 = vmatprep.subr.bf16.mxu0 0
    %994 = vmatpush1.bf16.msra.mxu0 0
    %995 = vmatprep.subr.bf16.mxu0 0
    %996 = vmatpush1.bf16.msra.mxu0 0
    %997 = vmatprep.subr.bf16.mxu0 0
    %998 = vmatpush1.bf16.msra.mxu0 0
    %999 = vmatprep.subr.bf16.mxu0 0
    %1000 = vmatpush1.bf16.msra.mxu0 0
    %1001 = vmatprep.subr.bf16.mxu0 0
    %1002 = vmatpush1.bf16.msra.mxu0 0
    %1003 = vmatprep.subr.bf16.mxu0 0
    %1004 = vmatpush1.bf16.msra.mxu0 0
    %1005 = vmatprep.mubr.bf16.mxu0 0
    %1006 = vmatmul.mubr.bf16.gmra.mrb[0].mxu0 %v968
    %v1007 = vpop.f32.mrb[0].mxu0
    %v1008 = vadd.f32 0.0, %v1007
    %v1009 = vpop.f32.mrb[0].mxu0
    %v1010 = vpop.f32.mrb[0].mxu0
    %v1011 = vpop.f32.mrb[0].mxu0
    %1012 = vdwg.mxu0
    %v1014 = vrot.slane %v652, 4
    %1015 = vrot.lane.b32.xlu0 %v354, 40
    %v1016 = vpop.permute.xlu0 %1015
    %v1018 = vsel %vm151, %v1014, 0
    %v1021 = vsel %vm658, %v1016, 0
    %1023 = vmatprep.subr.bf16.mxu0 0
    %1024 = vmatpush1.bf16.msra.mxu0 %v1021
    %1025 = vmatprep.subr.bf16.mxu0 0
    %1026 = vmatpush1.bf16.msra.mxu0 0
    %1027 = vmatprep.subr.bf16.mxu0 0
    %1028 = vmatpush1.bf16.msra.mxu0 0
    %1029 = vmatprep.subr.bf16.mxu0 0
    %1030 = vmatpush1.bf16.msra.mxu0 0
    %1031 = vmatprep.subr.bf16.mxu0 0
    %1032 = vmatpush1.bf16.msra.mxu0 0
    %1033 = vmatprep.subr.bf16.mxu0 0
    %1034 = vmatpush1.bf16.msra.mxu0 0
    %1035 = vmatprep.subr.bf16.mxu0 0
    %1036 = vmatpush1.bf16.msra.mxu0 0
    %1037 = vmatprep.subr.bf16.mxu0 0
    %1038 = vmatpush1.bf16.msra.mxu0 0
    %1039 = vmatprep.subr.bf16.mxu0 0
    %1040 = vmatpush1.bf16.msra.mxu0 0
    %1041 = vmatprep.subr.bf16.mxu0 0
    %1042 = vmatpush1.bf16.msra.mxu0 0
    %1043 = vmatprep.subr.bf16.mxu0 0
    %1044 = vmatpush1.bf16.msra.mxu0 0
    %1045 = vmatprep.subr.bf16.mxu0 0
    %1046 = vmatpush1.bf16.msra.mxu0 0
    %1047 = vmatprep.subr.bf16.mxu0 0
    %1048 = vmatpush1.bf16.msra.mxu0 0
    %1049 = vmatprep.subr.bf16.mxu0 0
    %1050 = vmatpush1.bf16.msra.mxu0 0
    %1051 = vmatprep.subr.bf16.mxu0 0
    %1052 = vmatpush1.bf16.msra.mxu0 0
    %1053 = vmatprep.subr.bf16.mxu0 0
    %1054 = vmatpush1.bf16.msra.mxu0 0
    %1055 = vmatprep.mubr.bf16.mxu0 0
    %1056 = vmatmul.mubr.bf16.gmra.mrb[0].mxu0 %v1018
    %v1057 = vpop.f32.mrb[0].mxu0
    %v1058 = vadd.f32 0.0, %v1057
    %v1059 = vpop.f32.mrb[0].mxu0
    %v1060 = vpop.f32.mrb[0].mxu0
    %v1061 = vpop.f32.mrb[0].mxu0
    %1062 = vdwg.mxu0
    %1064 = vrot.lane.b32.xlu0 %v960, 8
    %v1065 = vpop.permute.xlu0 %1064
    %1068 = vrot.lane.b32.xlu0 %v1008, 16
    %v1069 = vpop.permute.xlu0 %1068
    %1072 = vrot.lane.b32.xlu0 %v1058, 24
    %v1073 = vpop.permute.xlu0 %1072
    %v1075 = vsel %vm151, %v910, %v1065
    %v1076 = vsel %vm863, %v1075, %v1069
    %v1077 = vsel %vm865, %v1076, %v1073
    %v1078 = vld [vmem:[#allocation7] sm:$0xf]
    %v1079 = vld [vmem:[#allocation7 + $0x4] sm:$0xf]
    %v1080 = vld [vmem:[#allocation7 + $0x8] sm:$0xf]
    %v1081 = vld [vmem:[#allocation7 + $0xc] sm:$0xf]
    %v1082 = vpack.c.bf16 %v1077, %v866
    %v1083 = vlaneseq
    %v1084 = vshrl.u32 %v1083, 7
    %v1085 = vsub.s32 1, %v1084
    %v1086 = vrot.slane %v70, %v1085
    %v1091 = vunpack.c.l.b16 %v1078
    %v1092 = vunpack.c.l.b16 %v1079
    %v1093 = vunpack.c.l.b16 %v1080
    %v1094 = vunpack.c.l.b16 %v1081
    %v1095 = vpack.c.b16 %v1092, %v1091
    %v1096 = vpack.c.b16 %v1094, %v1093
    %v1100 = vsel %vm96, %v1082, 0
    %1102 = vmatprep.subr.bf16.mxu0 0
    %1103 = vmatpush1.bf16.msra.mxu0 %v1095
    %1104 = vmatprep.subr.bf16.mxu0 0
    %1105 = vmatpush1.bf16.msra.mxu0 %v1096
    %1106 = vmatprep.subr.bf16.mxu0 0
    %1107 = vmatpush1.bf16.msra.mxu0 0
    %1108 = vmatprep.subr.bf16.mxu0 0
    %1109 = vmatpush1.bf16.msra.mxu0 0
    %1110 = vmatprep.subr.bf16.mxu0 0
    %1111 = vmatpush1.bf16.msra.mxu0 0
    %1112 = vmatprep.subr.bf16.mxu0 0
    %1113 = vmatpush1.bf16.msra.mxu0 0
    %1114 = vmatprep.subr.bf16.mxu0 0
    %1115 = vmatpush1.bf16.msra.mxu0 0
    %1116 = vmatprep.subr.bf16.mxu0 0
    %1117 = vmatpush1.bf16.msra.mxu0 0
    %1118 = vmatprep.subr.bf16.mxu0 0
    %1119 = vmatpush1.bf16.msra.mxu0 0
    %1120 = vmatprep.subr.bf16.mxu0 0
    %1121 = vmatpush1.bf16.msra.mxu0 0
    %1122 = vmatprep.subr.bf16.mxu0 0
    %1123 = vmatpush1.bf16.msra.mxu0 0
    %1124 = vmatprep.subr.bf16.mxu0 0
    %1125 = vmatpush1.bf16.msra.mxu0 0
    %1126 = vmatprep.subr.bf16.mxu0 0
    %1127 = vmatpush1.bf16.msra.mxu0 0
    %1128 = vmatprep.subr.bf16.mxu0 0
    %1129 = vmatpush1.bf16.msra.mxu0 0
    %1130 = vmatprep.subr.bf16.mxu0 0
    %1131 = vmatpush1.bf16.msra.mxu0 0
    %1132 = vmatprep.subr.bf16.mxu0 0
    %1133 = vmatpush1.bf16.msra.mxu0 0
    %1134 = vmatprep.mubr.bf16.mxu0 0
    %1135 = vmatmul.mubr.bf16.gmra.mrb[0].mxu0 %v1100
    %v1136 = vpop.f32.mrb[0].mxu0
    %v1137 = vadd.f32 %v1086, %v1136
    %v1138 = vpop.f32.mrb[0].mxu0
    %v1139 = vpop.f32.mrb[0].mxu0
    %v1140 = vadd.f32 %v1086, %v1139
    %v1141 = vpop.f32.mrb[0].mxu0
    %1142 = vdwg.mxu0
    %v1143 = vadd.f32 %v66, %v1137
    %v1144 = vadd.f32 %v67, %v1140
    %v1145 = vsel %vm96, %v1143, 0.0
    %1146 = vadd.xlane.f32.xlu0 %v1145
    %v1147 = vpop.xlane.xlu0 %1146
    %v1148 = vsel %vm96, %v1144, 0.0
    %1149 = vadd.xlane.f32.xlu0 %v1148
    %v1150 = vpop.xlane.xlu0 %1149
    %v1151 = vrcp.pop 32.0
    %v1152 = vmul.f32 %v1147, %v1151
    %v1153 = vmul.f32 %v1150, %v1151
    %v1154 = vsub.f32 %v1143, %v1152
    %v1155 = vsub.f32 %v1144, %v1153
    %v1156 = vmul.f32 %v1154, %v1154
    %v1157 = vmul.f32 %v1155, %v1155
    %v1158 = vsel %vm96, %v1156, 0.0
    %1159 = vadd.xlane.f32.xlu0 %v1158
    %v1160 = vpop.xlane.xlu0 %1159
    %v1161 = vsel %vm96, %v1157, 0.0
    %1162 = vadd.xlane.f32.xlu0 %v1161
    %v1163 = vpop.xlane.xlu0 %1162
    %v1164 = vmul.f32 %v1160, %v1151
    %v1165 = vmul.f32 %v1163, %v1151
    %v1166 = vadd.f32 %v1164, 1e-05
    %v1167 = vadd.f32 %v1165, 1e-05
    %v1168 = vrsqrt.pop %v1166
    %v1169 = vrsqrt.pop %v1167
    %v1170 = vmul.f32 %v1154, %v1168
    %v1171 = vmul.f32 %v1155, %v1169
    %v1172 = vlaneseq
    %v1173 = vshrl.u32 %v1172, 7
    %v1174 = vsub.s32 2, %v1173
    %v1175 = vrot.slane %v70, %v1174
    %v1176 = vmul.f32 %v1170, %v1175
    %v1177 = vmul.f32 %v1171, %v1175
    %v1178 = vlaneseq
    %v1179 = vshrl.u32 %v1178, 7
    %v1180 = vsub.s32 3, %v1179
    %v1181 = vrot.slane %v70, %v1180
    %v1182 = vadd.f32 %v1176, %v1181
    %v1183 = vadd.f32 %v1177, %v1181
    %v1184 = vld [vmem:[#allocation7 + $0x10] sm:$0xf]
    %v1185 = vld [vmem:[#allocation7 + $0x14] sm:$0xf]
    %v1186 = vld [vmem:[#allocation7 + $0x18] sm:$0xf]
    %v1187 = vld [vmem:[#allocation7 + $0x1c] sm:$0xf]
    %v1188 = vld [vmem:[#allocation7 + $0x20] sm:$0xf]
    %v1189 = vld [vmem:[#allocation7 + $0x24] sm:$0xf]
    %v1190 = vld [vmem:[#allocation7 + $0x28] sm:$0xf]
    %v1191 = vld [vmem:[#allocation7 + $0x2c] sm:$0xf]
    %v1192 = vld [vmem:[#allocation7 + $0x30] sm:$0xf]
    %v1193 = vld [vmem:[#allocation7 + $0x34] sm:$0xf]
    %v1194 = vld [vmem:[#allocation7 + $0x38] sm:$0xf]
    %v1195 = vld [vmem:[#allocation7 + $0x3c] sm:$0xf]
    %v1196 = vpack.c.bf16 %v1183, %v1182
    %v1197 = vlaneseq
    %v1198 = vshrl.u32 %v1197, 7
    %v1199 = vsub.s32 4, %v1198
    %v1200 = vrot.slane %v70, %v1199
    %v1205 = vunpack.c.l.b16 %v1184
    %v1206 = vunpack.c.l.b16 %v1185
    %v1207 = vunpack.c.l.b16 %v1186
    %v1208 = vunpack.c.l.b16 %v1187
    %v1209 = vpack.c.b16 %v1206, %v1205
    %v1210 = vpack.c.b16 %v1208, %v1207
    %v1214 = vsel %vm96, %v1196, 0
    %1216 = vmatprep.subr.bf16.mxu0 0
    %1217 = vmatpush1.bf16.msra.mxu0 %v1209
    %1218 = vmatprep.subr.bf16.mxu0 0
    %1219 = vmatpush1.bf16.msra.mxu0 %v1210
    %1220 = vmatprep.subr.bf16.mxu0 0
    %1221 = vmatpush1.bf16.msra.mxu0 0
    %1222 = vmatprep.subr.bf16.mxu0 0
    %1223 = vmatpush1.bf16.msra.mxu0 0
    %1224 = vmatprep.subr.bf16.mxu0 0
    %1225 = vmatpush1.bf16.msra.mxu0 0
    %1226 = vmatprep.subr.bf16.mxu0 0
    %1227 = vmatpush1.bf16.msra.mxu0 0
    %1228 = vmatprep.subr.bf16.mxu0 0
    %1229 = vmatpush1.bf16.msra.mxu0 0
    %1230 = vmatprep.subr.bf16.mxu0 0
    %1231 = vmatpush1.bf16.msra.mxu0 0
    %1232 = vmatprep.subr.bf16.mxu0 0
    %1233 = vmatpush1.bf16.msra.mxu0 0
    %1234 = vmatprep.subr.bf16.mxu0 0
    %1235 = vmatpush1.bf16.msra.mxu0 0
    %1236 = vmatprep.subr.bf16.mxu0 0
    %1237 = vmatpush1.bf16.msra.mxu0 0
    %1238 = vmatprep.subr.bf16.mxu0 0
    %1239 = vmatpush1.bf16.msra.mxu0 0
    %1240 = vmatprep.subr.bf16.mxu0 0
    %1241 = vmatpush1.bf16.msra.mxu0 0
    %1242 = vmatprep.subr.bf16.mxu0 0
    %1243 = vmatpush1.bf16.msra.mxu0 0
    %1244 = vmatprep.subr.bf16.mxu0 0
    %1245 = vmatpush1.bf16.msra.mxu0 0
    %1246 = vmatprep.subr.bf16.mxu0 0
    %1247 = vmatpush1.bf16.msra.mxu0 0
    %1248 = vmatprep.mubr.bf16.mxu0 0
    %1249 = vmatmul.mubr.bf16.gmra.mrb[0].mxu0 %v1214
    %v1250 = vpop.f32.mrb[0].mxu0
    %v1251 = vadd.f32 %v1200, %v1250
    %v1252 = vpop.f32.mrb[0].mxu0
    %v1253 = vpop.f32.mrb[0].mxu0
    %v1254 = vadd.f32 %v1200, %v1253
    %v1255 = vpop.f32.mrb[0].mxu0
    %1256 = vdwg.mxu0
    %v1257 = vmul.f32 %v1251, 0.5
    %v1258 = vmul.f32 %v1254, 0.5
    %v1259 = vmul.f32 %v1251, 0.70710677
    %v1260 = vmul.f32 %v1254, 0.70710677
    %v1261 = verf.f32.pop %v1259
    %v1262 = verf.f32.pop %v1260
    %v1263 = vadd.f32 %v1261, 1.0
    %v1264 = vadd.f32 %v1262, 1.0
    %v1265 = vmul.f32 %v1257, %v1263
    %v1266 = vmul.f32 %v1258, %v1264
    %v1267 = vpack.c.bf16 %v1266, %v1265
    %v1268 = vlaneseq
    %v1269 = vshrl.u32 %v1268, 7
    %v1270 = vsub.s32 5, %v1269
    %v1271 = vrot.slane %v70, %v1270
    %v1280 = vunpack.c.l.b16 %v1188
    %v1281 = vunpack.c.l.b16 %v1189
    %v1282 = vunpack.c.l.b16 %v1190
    %v1283 = vunpack.c.l.b16 %v1191
    %v1284 = vunpack.c.l.b16 %v1192
    %v1285 = vunpack.c.l.b16 %v1193
    %v1286 = vunpack.c.l.b16 %v1194
    %v1287 = vunpack.c.l.b16 %v1195
    %v1288 = vpack.c.b16 %v1281, %v1280
    %v1289 = vpack.c.b16 %v1283, %v1282
    %v1290 = vpack.c.b16 %v1285, %v1284
    %v1291 = vpack.c.b16 %v1287, %v1286
    %vm1296 = vcmask 523264
    %v1298 = vsel %vm1296, %v1267, 0
    %1300 = vmatprep.subr.bf16.mxu0 0
    %1301 = vmatpush1.bf16.msra.mxu0 %v1288
    %1302 = vmatprep.subr.bf16.mxu0 0
    %1303 = vmatpush1.bf16.msra.mxu0 %v1289
    %1304 = vmatprep.subr.bf16.mxu0 0
    %1305 = vmatpush1.bf16.msra.mxu0 %v1290
    %1306 = vmatprep.subr.bf16.mxu0 0
    %1307 = vmatpush1.bf16.msra.mxu0 %v1291
    %1308 = vmatprep.subr.bf16.mxu0 0
    %1309 = vmatpush1.bf16.msra.mxu0 0
    %1310 = vmatprep.subr.bf16.mxu0 0
    %1311 = vmatpush1.bf16.msra.mxu0 0
    %1312 = vmatprep.subr.bf16.mxu0 0
    %1313 = vmatpush1.bf16.msra.mxu0 0
    %1314 = vmatprep.subr.bf16.mxu0 0
    %1315 = vmatpush1.bf16.msra.mxu0 0
    %1316 = vmatprep.subr.bf16.mxu0 0
    %1317 = vmatpush1.bf16.msra.mxu0 0
    %1318 = vmatprep.subr.bf16.mxu0 0
    %1319 = vmatpush1.bf16.msra.mxu0 0
    %1320 = vmatprep.subr.bf16.mxu0 0
    %1321 = vmatpush1.bf16.msra.mxu0 0
    %1322 = vmatprep.subr.bf16.mxu0 0
    %1323 = vmatpush1.bf16.msra.mxu0 0
    %1324 = vmatprep.subr.bf16.mxu0 0
    %1325 = vmatpush1.bf16.msra.mxu0 0
    %1326 = vmatprep.subr.bf16.mxu0 0
    %1327 = vmatpush1.bf16.msra.mxu0 0
    %1328 = vmatprep.subr.bf16.mxu0 0
    %1329 = vmatpush1.bf16.msra.mxu0 0
    %1330 = vmatprep.subr.bf16.mxu0 0
    %1331 = vmatpush1.bf16.msra.mxu0 0
    %1332 = vmatprep.mubr.bf16.mxu0 0
    %1333 = vmatmul.mubr.bf16.gmra.mrb[0].mxu0 %v1298
    %v1334 = vpop.f32.mrb[0].mxu0
    %v1335 = vadd.f32 %v1271, %v1334
    %v1336 = vpop.f32.mrb[0].mxu0
    %v1337 = vpop.f32.mrb[0].mxu0
    %v1338 = vadd.f32 %v1271, %v1337
    %v1339 = vpop.f32.mrb[0].mxu0
    %1340 = vdwg.mxu0
    %v1341 = vadd.f32 %v1182, %v1335
    %v1342 = vadd.f32 %v1183, %v1338
    %v1343 = vsel %vm96, %v1341, 0.0
    %1344 = vadd.xlane.f32.xlu0 %v1343
    %v1345 = vpop.xlane.xlu0 %1344
    %v1346 = vsel %vm96, %v1342, 0.0
    %1347 = vadd.xlane.f32.xlu0 %v1346
    %v1348 = vpop.xlane.xlu0 %1347
    %v1349 = vmul.f32 %v1345, %v1151
    %v1350 = vmul.f32 %v1348, %v1151
    %v1351 = vsub.f32 %v1341, %v1349
    %v1352 = vsub.f32 %v1342, %v1350
    %v1353 = vmul.f32 %v1351, %v1351
    %v1354 = vmul.f32 %v1352, %v1352
    %v1355 = vsel %vm96, %v1353, 0.0
    %1356 = vadd.xlane.f32.xlu0 %v1355
    %v1357 = vpop.xlane.xlu0 %1356
    %v1358 = vsel %vm96, %v1354, 0.0
    %1359 = vadd.xlane.f32.xlu0 %v1358
    %v1360 = vpop.xlane.xlu0 %1359
    %v1361 = vmul.f32 %v1357, %v1151
    %v1362 = vmul.f32 %v1360, %v1151
    %v1363 = vadd.f32 %v1361, 1e-05
    %v1364 = vadd.f32 %v1362, 1e-05
    %v1365 = vrsqrt.pop %v1363
    %v1366 = vrsqrt.pop %v1364
    %v1367 = vmul.f32 %v1351, %v1365
    %v1368 = vmul.f32 %v1352, %v1366
    %v1369 = vlaneseq
    %v1370 = vshrl.u32 %v1369, 7
    %v1371 = vsub.s32 6, %v1370
    %v1372 = vrot.slane %v70, %v1371
    %v1373 = vmul.f32 %v1367, %v1372
    %v1374 = vmul.f32 %v1368, %v1372
    %v1375 = vlaneseq
    %v1376 = vshrl.u32 %v1375, 7
    %v1377 = vsub.s32 7, %v1376
    %v1378 = vrot.slane %v70, %v1377
    %v1379 = vadd.f32 %v1373, %v1378
    %v1380 = vadd.f32 %v1374, %v1378
    %1381 = vst.msk [vmem:[#allocation8] sm:$0xff] %vm96, %v1379
    %1382 = vst.msk [vmem:[#allocation8 + $0x8] sm:$0xff] %vm96, %v1380
    // Predicated region
    $region34: #{transformer_encoder_layer.1} parent=1 // pred_check
      _
    $region35: #{transformer_encoder_layer.1} parent=1 // pred_check_branch
      %1384 = sbr.rel (0) target = $region37
    $region36: #{transformer_encoder_layer.1} parent=1 // pred_region
      %s1386 = ssub.s32 256, 256
      %1387 = vsyncadd [#allocation4], %s1386
      %s1388 = sshll.u32 [#allocation8], 4
      %s1389 = int_to_ptr.vmem [resolvable:$true] %s1388
      %1394 = dma.vmem_to_hbm [thread:$0]  %s1389, 256, %s5, [#allocation4], 128, 128, 8
    $region37: #{transformer_encoder_layer.1} parent=1 // pred_fallthru
      _
    // Predicated region
    $region38: #{transformer_encoder_layer.1} parent=1 // pred_check
      _
    $region39: #{transformer_encoder_layer.1} parent=1 // pred_check_branch
      %1396 = sbr.rel (0) target = $region41
    $region40: #{transformer_encoder_layer.1} parent=1 // pred_region
      %s1398 = ssub.s32 1024, 1024
      %1399 = vsyncadd [#allocation10], %s1398
      %s1400 = sshll.u32 [#allocation9], 4
      %s1401 = int_to_ptr.vmem [resolvable:$true] %s1400
      %1406 = dma.vmem_to_hbm [thread:$0]  %s1401, 1024, %s6, [#allocation10], 128, 128, 8
    $region41: #{transformer_encoder_layer.1} parent=1 // pred_fallthru
      _
    // Predicated region
    $region42: #{transformer_encoder_layer.1} parent=1 // pred_check
      _
    $region43: #{transformer_encoder_layer.1} parent=1 // pred_check_branch
      %1408 = sbr.rel (0) target = $region45
    $region44: #{transformer_encoder_layer.1} parent=1 // pred_region
      %1409 = dma.done [#allocation4], 256
    $region45: #{transformer_encoder_layer.1} parent=1 // pred_fallthru
      _
    // Predicated region
    $region46: #{transformer_encoder_layer.1} parent=1 // pred_check
      _
    $region47: #{transformer_encoder_layer.1} parent=1 // pred_check_branch
      %1411 = sbr.rel (0) target = $region49
    $region48: #{transformer_encoder_layer.1} parent=1 // pred_region
      %1412 = dma.done [#allocation10], 1024
    $region49: #{transformer_encoder_layer.1} parent=1 // pred_fallthru
      _
    %1413 = vsyncpa [#allocation3], 1
    %1414 = vsyncpa [#allocation6], 1
    %1415 = vsyncpa [#allocation4], 1
    %1416 = vsyncpa [#allocation10], 1

</llo_original>
